<compile_context>
chip_gen: v5e
topology: v5e:2x2
jax: 0.10.0
libtpu: 0.0.40
codegen_flags: <defaults>
</compile_context>

<pallas_src>
import functools

import jax
import jax.numpy as jnp
import numpy as np
from jax.experimental import pallas as pl
from jax.experimental.pallas import tpu as pltpu

NEG_SLOPE = 0.01  # torch.nn.LeakyReLU default negative_slope


def _round_up(x, m):
    return ((x + m - 1) // m) * m


def _rpn_head_kernel(x_ref, dww_ref, dwb_ref, wcat_ref, obj_ref, del_ref,
                     xpad_s, *, H, W, C, A, A_pad, AD, use_bf16_matmul):
    """One batch element: depthwise 3x3 + fused (obj|delta) 1x1 + LeakyReLU.

    x_ref   : (1, H, W, C)        NHWC input tile
    dww_ref : (9, 1, C)           depthwise weights, tap-major (k = 3*dh + dw)
    dwb_ref : (1, C)              depthwise bias
    wcat_ref: (A_pad + AD, C)     [w_obj ; zero pad ; w_delta], output-major
    obj_ref : (1, A,  H*W)
    del_ref : (1, AD, H*W)
    xpad_s  : (H+2, W+2, C) f32 VMEM scratch (zero-padded input)
    """
    # ---- in-kernel zero padding (border re-zeroed every step: megacore-safe) ----
    zrow = jnp.zeros((1, W + 2, C), jnp.float32)
    xpad_s[0:1, :, :] = zrow
    xpad_s[H + 1:H + 2, :, :] = zrow
    zcol = jnp.zeros((H, 1, C), jnp.float32)
    xpad_s[1:H + 1, 0:1, :] = zcol
    xpad_s[1:H + 1, W + 1:W + 2, :] = zcol
    xpad_s[1:H + 1, 1:W + 1, :] = x_ref[0].astype(jnp.float32)

    # ---- depthwise 3x3 on the VPU (channels on the 128-lane axis) ----
    xp = xpad_s[...]                                    # (H+2, W+2, C)
    cols = [xp[:, dw:dw + W, :] for dw in range(3)]     # 3 W-shifted views (reused)
    wk = dww_ref[...]                                   # (9, 1, C)
    acc = cols[0][0:H] * wk[0] + dwb_ref[...]           # init: tap(0,0) + bias
    for k in range(1, 9):
        dh, dw = divmod(k, 3)
        acc = acc + cols[dw][dh:dh + H] * wk[k]         # H shift = free major slice

    # ---- fused 1x1 convs: one MXU matmul, channel-major lane-dense output ----
    emb2 = acc.reshape(H * W, C)                        # layout-preserving collapse
    wcat = wcat_ref[...]
    if use_bf16_matmul:
        emb2 = emb2.astype(jnp.bfloat16)
        wcat = wcat.astype(jnp.bfloat16)
    out_t = jax.lax.dot_general(                        # (A_pad + AD, H*W)
        wcat, emb2, (((1,), (1,)), ((), ())),
        preferred_element_type=jnp.float32)
    out_t = jnp.where(out_t >= 0, out_t, NEG_SLOPE * out_t)   # one LeakyReLU

    # Both slices start on an 8-sublane boundary (0 and A_pad).
    obj_ref[...] = out_t[0:A].reshape(1, A, H * W).astype(obj_ref.dtype)
    del_ref[...] = out_t[A_pad:A_pad + AD].reshape(1, AD, H * W).astype(del_ref.dtype)


def prepare_rpn_head_params(dw_w_oihw, dw_b, w_obj_oihw, w_del_oihw):
    """Convert PyTorch-layout weights to kernel layouts (done once)."""
    C = dw_w_oihw.shape[0]
    A = w_obj_oihw.shape[0]
    A_pad = _round_up(A, 8)
    dw_w9 = jnp.transpose(dw_w_oihw[:, 0], (1, 2, 0)).reshape(9, 1, C)   # tap-major
    dw_b_1c = dw_b.reshape(1, C)
    # [w_obj ; zero rows up to 8-sublane boundary ; w_delta], output-major (rows x C)
    w_cat_pad = jnp.concatenate(
        [w_obj_oihw[:, :, 0, 0],
         jnp.zeros((A_pad - A, C), dw_w_oihw.dtype),
         w_del_oihw[:, :, 0, 0]], axis=0)
    return dw_w9, dw_b_1c, w_cat_pad, A


def rpn_head_level(x_nchw, dw_w9, dw_b_1c, w_cat_pad, num_cell_anchors):
    """Run the fused RPN head on one feature map (NCHW in, NCHW out)."""
    N, C, H, W = x_nchw.shape
    A = num_cell_anchors
    A_pad = _round_up(A, 8)
    A_total_pad = w_cat_pad.shape[0]
    AD = A_total_pad - A_pad
    HW = H * W

    # NCHW -> NHWC so channels sit on the lane axis for the depthwise conv.
    # (No wrapper-side jnp.pad: the conv halo is built inside the kernel.)
    x_nhwc = jnp.transpose(x_nchw, (0, 2, 3, 1))

    kernel = functools.partial(
        _rpn_head_kernel, H=H, W=W, C=C, A=A, A_pad=A_pad, AD=AD,
        use_bf16_matmul=(C >= 128))

    obj3, del3 = pl.pallas_call(
        kernel,
        out_shape=(
            jax.ShapeDtypeStruct((N, A, HW), x_nchw.dtype),
            jax.ShapeDtypeStruct((N, AD, HW), x_nchw.dtype),
        ),
        grid_spec=pltpu.PrefetchScalarGridSpec(
            num_scalar_prefetch=0,
            grid=(N,),
            in_specs=[
                pl.BlockSpec((1, H, W, C), lambda n: (n, 0, 0, 0)),
                pl.BlockSpec((9, 1, C), lambda n: (0, 0, 0)),
                pl.BlockSpec((1, C), lambda n: (0, 0)),
                pl.BlockSpec((A_total_pad, C), lambda n: (0, 0)),
            ],
            out_specs=[
                pl.BlockSpec((1, A, HW), lambda n: (n, 0, 0)),
                pl.BlockSpec((1, AD, HW), lambda n: (n, 0, 0)),
            ],
            scratch_shapes=[pltpu.VMEM((H + 2, W + 2, C), jnp.float32)],
        ),
        compiler_params=pltpu.CompilerParams(
            dimension_semantics=("parallel",),
            vmem_limit_bytes=64 * 1024 * 1024),
    )(x_nhwc, dw_w9, dw_b_1c, w_cat_pad)

    # Channel-major kernel outputs: only a free trailing-dim reshape remains.
    return obj3.reshape(N, A, H, W), del3.reshape(N, AD, H, W)


def rpn_head_forward(input_features, params):
    """Mirror of RPN_Head.forward: dict of feature maps -> (logits list, deltas list)."""
    dw_w9, dw_b_1c, w_cat_pad, num_cell_anchors = params
    pred_objectness_logits, pred_anchor_deltas = [], []
    for _, feature_map in input_features.items():
        o, d = rpn_head_level(feature_map, dw_w9, dw_b_1c, w_cat_pad,
                              num_cell_anchors)
        pred_objectness_logits.append(o)
        pred_anchor_deltas.append(d)
    return pred_objectness_logits, pred_anchor_deltas


if __name__ == "__main__":
    # Small deterministic setup consistent with the module's __init__.
    N, C, A, box_dim = 2, 32, 3, 4           # in_channels=32, num_cell_anchors=3
    key = jax.random.PRNGKey(0)
    k1, k2, k3, k4, kx1, kx2 = jax.random.split(key, 6)

    # Parameters in PyTorch layouts first (for the reference check) ...
    dw_w_oihw = jax.random.normal(k1, (C, 1, 3, 3), jnp.float32) * 0.1   # depthwise
    dw_b = jax.random.normal(k2, (C,), jnp.float32) * 0.1
    w_obj_oihw = jax.random.normal(k3, (A, C, 1, 1), jnp.float32) * 0.1
    w_del_oihw = jax.random.normal(k4, (A * box_dim, C, 1, 1), jnp.float32) * 0.1

    # ... converted once to kernel layouts.
    params = prepare_rpn_head_params(dw_w_oihw, dw_b, w_obj_oihw, w_del_oihw)

    # Dict of L=2 feature maps, NCHW, as the PyTorch module expects.
    feats = {
        "p3": jax.random.normal(kx1, (N, C, 16, 16), jnp.float32),
        "p4": jax.random.normal(kx2, (N, C, 8, 8), jnp.float32),
    }

    objs, dels = rpn_head_forward(feats, params)
    jax.block_until_ready((objs, dels))

    # Pure-JAX reference check (depthwise conv + 1x1 convs + LeakyReLU).
    for (name, x), o, d in zip(feats.items(), objs, dels):
        emb = jax.lax.conv_general_dilated(
            x, dw_w_oihw, window_strides=(1, 1), padding=((1, 1), (1, 1)),
            dimension_numbers=("NCHW", "OIHW", "NCHW"), feature_group_count=C)
        emb = emb + dw_b[None, :, None, None]
        o_ref = jnp.einsum("nchw,ac->nahw", emb, w_obj_oihw[:, :, 0, 0])
        o_ref = jnp.where(o_ref >= 0, o_ref, NEG_SLOPE * o_ref)
        d_ref = jnp.einsum("nchw,ac->nahw", emb, w_del_oihw[:, :, 0, 0])
        d_ref = jnp.where(d_ref >= 0, d_ref, NEG_SLOPE * d_ref)
        np.testing.assert_allclose(np.asarray(o), np.asarray(o_ref),
                                   rtol=1e-4, atol=1e-4)
        np.testing.assert_allclose(np.asarray(d), np.asarray(d_ref),
                                   rtol=1e-4, atol=1e-4)
        assert o.shape == (N, A, x.shape[2], x.shape[3])
        assert d.shape == (N, A * box_dim, x.shape[2], x.shape[3])

    print("KERNEL_OK")
</pallas_src>

<mosaic_0001>
module attributes {stable_mosaic.version = 11 : i64} {
  func.func @_rpn_head_kernel(%arg0: i32, %arg1: memref<1x16x16x32xf32, #tpu.memory_space<vmem>>, %arg2: memref<9x1x32xf32, #tpu.memory_space<vmem>>, %arg3: memref<1x32xf32, #tpu.memory_space<vmem>>, %arg4: memref<20x32xf32, #tpu.memory_space<vmem>>, %arg5: memref<1x3x256xf32, #tpu.memory_space<vmem>>, %arg6: memref<1x12x256xf32, #tpu.memory_space<vmem>>, %arg7: memref<18x18x32xf32, #tpu.memory_space<vmem>>) attributes {dimension_semantics = [#tpu.dimension_semantics<parallel>], iteration_bounds = array<i64: 2>, scalar_prefetch = 0 : i64, scratch_operands = 1 : i64, tpu.core_type = #tpu.core_type<tc>, window_params = [{transform_indices = @transform_0, window_bounds = array<i64: 1, 16, 16, 32>}, {pipeline_mode = #tpu.pipeline_mode<synchronous>, transform_indices = @transform_1, window_bounds = array<i64: 9, 1, 32>}, {pipeline_mode = #tpu.pipeline_mode<synchronous>, transform_indices = @transform_2, window_bounds = array<i64: 1, 32>}, {pipeline_mode = #tpu.pipeline_mode<synchronous>, transform_indices = @transform_3, window_bounds = array<i64: 20, 32>}, {transform_indices = @transform_4, window_bounds = array<i64: 1, 3, 256>}, {transform_indices = @transform_5, window_bounds = array<i64: 1, 12, 256>}]} {
    %cst = arith.constant 0.000000e+00 : f32
    %0 = vector.broadcast %cst : f32 to vector<1x18x32xf32>
    %c0 = arith.constant 0 : index
    %c0_0 = arith.constant 0 : index
    %c0_1 = arith.constant 0 : index
    %1 = vector.load %arg7[%c0, %c0_0, %c0_1] : memref<18x18x32xf32, #tpu.memory_space<vmem>>, vector<1x18x32xf32>
    tpu.vector_store %arg7[%c0, %c0_0, %c0_1], %0 {strides = array<i32>} : memref<18x18x32xf32, #tpu.memory_space<vmem>>, vector<1x18x32xf32>,
    %c17 = arith.constant 17 : index
    %c0_2 = arith.constant 0 : index
    %c0_3 = arith.constant 0 : index
    %2 = vector.load %arg7[%c17, %c0_2, %c0_3] : memref<18x18x32xf32, #tpu.memory_space<vmem>>, vector<1x18x32xf32>
    tpu.vector_store %arg7[%c17, %c0_2, %c0_3], %0 {strides = array<i32>} : memref<18x18x32xf32, #tpu.memory_space<vmem>>, vector<1x18x32xf32>,
    %cst_4 = arith.constant 0.000000e+00 : f32
    %3 = vector.broadcast %cst_4 : f32 to vector<16x1x32xf32>
    %c1 = arith.constant 1 : index
    %c0_5 = arith.constant 0 : index
    %c0_6 = arith.constant 0 : index
    %4 = vector.load %arg7[%c1, %c0_5, %c0_6] : memref<18x18x32xf32, #tpu.memory_space<vmem>>, vector<16x1x32xf32>
    tpu.vector_store %arg7[%c1, %c0_5, %c0_6], %3 {strides = array<i32>} : memref<18x18x32xf32, #tpu.memory_space<vmem>>, vector<16x1x32xf32>,
    %c1_7 = arith.constant 1 : index
    %c17_8 = arith.constant 17 : index
    %c0_9 = arith.constant 0 : index
    %5 = vector.load %arg7[%c1_7, %c17_8, %c0_9] : memref<18x18x32xf32, #tpu.memory_space<vmem>>, vector<16x1x32xf32>
    tpu.vector_store %arg7[%c1_7, %c17_8, %c0_9], %3 {strides = array<i32>} : memref<18x18x32xf32, #tpu.memory_space<vmem>>, vector<16x1x32xf32>,
    %c0_10 = arith.constant 0 : index
    %c0_11 = arith.constant 0 : index
    %c0_12 = arith.constant 0 : index
    %c0_13 = arith.constant 0 : index
    %6 = vector.load %arg1[%c0_10, %c0_11, %c0_12, %c0_13] : memref<1x16x16x32xf32, #tpu.memory_space<vmem>>, vector<1x16x16x32xf32>
    %7 = vector.shape_cast %6 : vector<1x16x16x32xf32> to vector<16x16x32xf32>
    %c1_14 = arith.constant 1 : index
    %c1_15 = arith.constant 1 : index
    %c0_16 = arith.constant 0 : index
    %8 = vector.load %arg7[%c1_14, %c1_15, %c0_16] : memref<18x18x32xf32, #tpu.memory_space<vmem>>, vector<16x16x32xf32>
    tpu.vector_store %arg7[%c1_14, %c1_15, %c0_16], %7 {strides = array<i32>} : memref<18x18x32xf32, #tpu.memory_space<vmem>>, vector<16x16x32xf32>,
    %c0_17 = arith.constant 0 : index
    %c0_18 = arith.constant 0 : index
    %c0_19 = arith.constant 0 : index
    %9 = vector.load %arg7[%c0_17, %c0_18, %c0_19] : memref<18x18x32xf32, #tpu.memory_space<vmem>>, vector<18x18x32xf32>
    %10 = vector.extract_strided_slice %9 {offsets = [0, 0, 0], sizes = [18, 16, 32], strides = [1, 1, 1]} : vector<18x18x32xf32> to vector<18x16x32xf32>
    %11 = vector.extract_strided_slice %9 {offsets = [0, 1, 0], sizes = [18, 16, 32], strides = [1, 1, 1]} : vector<18x18x32xf32> to vector<18x16x32xf32>
    %12 = vector.extract_strided_slice %9 {offsets = [0, 2, 0], sizes = [18, 16, 32], strides = [1, 1, 1]} : vector<18x18x32xf32> to vector<18x16x32xf32>
    %c0_20 = arith.constant 0 : index
    %c0_21 = arith.constant 0 : index
    %c0_22 = arith.constant 0 : index
    %13 = vector.load %arg2[%c0_20, %c0_21, %c0_22] : memref<9x1x32xf32, #tpu.memory_space<vmem>>, vector<9x1x32xf32>
    %14 = vector.extract_strided_slice %10 {offsets = [0, 0, 0], sizes = [16, 16, 32], strides = [1, 1, 1]} : vector<18x16x32xf32> to vector<16x16x32xf32>
    %15 = vector.extract_strided_slice %13 {offsets = [0, 0, 0], sizes = [1, 1, 32], strides = [1, 1, 1]} : vector<9x1x32xf32> to vector<1x1x32xf32>
    %16 = vector.shape_cast %15 : vector<1x1x32xf32> to vector<1x32xf32>
    %17 = vector.shape_cast %16 : vector<1x32xf32> to vector<1x1x32xf32>
    %18 = vector.broadcast %17 : vector<1x1x32xf32> to vector<16x16x32xf32>
    %19 = arith.mulf %14, %18 : vector<16x16x32xf32>
    %c0_23 = arith.constant 0 : index
    %c0_24 = arith.constant 0 : index
    %20 = vector.load %arg3[%c0_23, %c0_24] : memref<1x32xf32, #tpu.memory_space<vmem>>, vector<1x32xf32>
    %21 = vector.shape_cast %20 : vector<1x32xf32> to vector<1x1x32xf32>
    %22 = vector.broadcast %21 : vector<1x1x32xf32> to vector<16x16x32xf32>
    %23 = arith.addf %19, %22 : vector<16x16x32xf32>
    %24 = vector.extract_strided_slice %11 {offsets = [0, 0, 0], sizes = [16, 16, 32], strides = [1, 1, 1]} : vector<18x16x32xf32> to vector<16x16x32xf32>
    %25 = vector.extract_strided_slice %13 {offsets = [1, 0, 0], sizes = [1, 1, 32], strides = [1, 1, 1]} : vector<9x1x32xf32> to vector<1x1x32xf32>
    %26 = vector.shape_cast %25 : vector<1x1x32xf32> to vector<1x32xf32>
    %27 = vector.shape_cast %26 : vector<1x32xf32> to vector<1x1x32xf32>
    %28 = vector.broadcast %27 : vector<1x1x32xf32> to vector<16x16x32xf32>
    %29 = arith.mulf %24, %28 : vector<16x16x32xf32>
    %30 = arith.addf %23, %29 : vector<16x16x32xf32>
    %31 = vector.extract_strided_slice %12 {offsets = [0, 0, 0], sizes = [16, 16, 32], strides = [1, 1, 1]} : vector<18x16x32xf32> to vector<16x16x32xf32>
    %32 = vector.extract_strided_slice %13 {offsets = [2, 0, 0], sizes = [1, 1, 32], strides = [1, 1, 1]} : vector<9x1x32xf32> to vector<1x1x32xf32>
    %33 = vector.shape_cast %32 : vector<1x1x32xf32> to vector<1x32xf32>
    %34 = vector.shape_cast %33 : vector<1x32xf32> to vector<1x1x32xf32>
    %35 = vector.broadcast %34 : vector<1x1x32xf32> to vector<16x16x32xf32>
    %36 = arith.mulf %31, %35 : vector<16x16x32xf32>
    %37 = arith.addf %30, %36 : vector<16x16x32xf32>
    %38 = vector.extract_strided_slice %10 {offsets = [1, 0, 0], sizes = [16, 16, 32], strides = [1, 1, 1]} : vector<18x16x32xf32> to vector<16x16x32xf32>
    %39 = vector.extract_strided_slice %13 {offsets = [3, 0, 0], sizes = [1, 1, 32], strides = [1, 1, 1]} : vector<9x1x32xf32> to vector<1x1x32xf32>
    %40 = vector.shape_cast %39 : vector<1x1x32xf32> to vector<1x32xf32>
    %41 = vector.shape_cast %40 : vector<1x32xf32> to vector<1x1x32xf32>
    %42 = vector.broadcast %41 : vector<1x1x32xf32> to vector<16x16x32xf32>
    %43 = arith.mulf %38, %42 : vector<16x16x32xf32>
    %44 = arith.addf %37, %43 : vector<16x16x32xf32>
    %45 = vector.extract_strided_slice %11 {offsets = [1, 0, 0], sizes = [16, 16, 32], strides = [1, 1, 1]} : vector<18x16x32xf32> to vector<16x16x32xf32>
    %46 = vector.extract_strided_slice %13 {offsets = [4, 0, 0], sizes = [1, 1, 32], strides = [1, 1, 1]} : vector<9x1x32xf32> to vector<1x1x32xf32>
    %47 = vector.shape_cast %46 : vector<1x1x32xf32> to vector<1x32xf32>
    %48 = vector.shape_cast %47 : vector<1x32xf32> to vector<1x1x32xf32>
    %49 = vector.broadcast %48 : vector<1x1x32xf32> to vector<16x16x32xf32>
    %50 = arith.mulf %45, %49 : vector<16x16x32xf32>
    %51 = arith.addf %44, %50 : vector<16x16x32xf32>
    %52 = vector.extract_strided_slice %12 {offsets = [1, 0, 0], sizes = [16, 16, 32], strides = [1, 1, 1]} : vector<18x16x32xf32> to vector<16x16x32xf32>
    %53 = vector.extract_strided_slice %13 {offsets = [5, 0, 0], sizes = [1, 1, 32], strides = [1, 1, 1]} : vector<9x1x32xf32> to vector<1x1x32xf32>
    %54 = vector.shape_cast %53 : vector<1x1x32xf32> to vector<1x32xf32>
    %55 = vector.shape_cast %54 : vector<1x32xf32> to vector<1x1x32xf32>
    %56 = vector.broadcast %55 : vector<1x1x32xf32> to vector<16x16x32xf32>
    %57 = arith.mulf %52, %56 : vector<16x16x32xf32>
    %58 = arith.addf %51, %57 : vector<16x16x32xf32>
    %59 = vector.extract_strided_slice %10 {offsets = [2, 0, 0], sizes = [16, 16, 32], strides = [1, 1, 1]} : vector<18x16x32xf32> to vector<16x16x32xf32>
    %60 = vector.extract_strided_slice %13 {offsets = [6, 0, 0], sizes = [1, 1, 32], strides = [1, 1, 1]} : vector<9x1x32xf32> to vector<1x1x32xf32>
    %61 = vector.shape_cast %60 : vector<1x1x32xf32> to vector<1x32xf32>
    %62 = vector.shape_cast %61 : vector<1x32xf32> to vector<1x1x32xf32>
    %63 = vector.broadcast %62 : vector<1x1x32xf32> to vector<16x16x32xf32>
    %64 = arith.mulf %59, %63 : vector<16x16x32xf32>
    %65 = arith.addf %58, %64 : vector<16x16x32xf32>
    %66 = vector.extract_strided_slice %11 {offsets = [2, 0, 0], sizes = [16, 16, 32], strides = [1, 1, 1]} : vector<18x16x32xf32> to vector<16x16x32xf32>
    %67 = vector.extract_strided_slice %13 {offsets = [7, 0, 0], sizes = [1, 1, 32], strides = [1, 1, 1]} : vector<9x1x32xf32> to vector<1x1x32xf32>
    %68 = vector.shape_cast %67 : vector<1x1x32xf32> to vector<1x32xf32>
    %69 = vector.shape_cast %68 : vector<1x32xf32> to vector<1x1x32xf32>
    %70 = vector.broadcast %69 : vector<1x1x32xf32> to vector<16x16x32xf32>
    %71 = arith.mulf %66, %70 : vector<16x16x32xf32>
    %72 = arith.addf %65, %71 : vector<16x16x32xf32>
    %73 = vector.extract_strided_slice %12 {offsets = [2, 0, 0], sizes = [16, 16, 32], strides = [1, 1, 1]} : vector<18x16x32xf32> to vector<16x16x32xf32>
    %74 = vector.extract_strided_slice %13 {offsets = [8, 0, 0], sizes = [1, 1, 32], strides = [1, 1, 1]} : vector<9x1x32xf32> to vector<1x1x32xf32>
    %75 = vector.shape_cast %74 : vector<1x1x32xf32> to vector<1x32xf32>
    %76 = vector.shape_cast %75 : vector<1x32xf32> to vector<1x1x32xf32>
    %77 = vector.broadcast %76 : vector<1x1x32xf32> to vector<16x16x32xf32>
    %78 = arith.mulf %73, %77 : vector<16x16x32xf32>
    %79 = arith.addf %72, %78 : vector<16x16x32xf32>
    %80 = vector.shape_cast %79 : vector<16x16x32xf32> to vector<256x32xf32>
    %c0_25 = arith.constant 0 : index
    %c0_26 = arith.constant 0 : index
    %81 = vector.load %arg4[%c0_25, %c0_26] : memref<20x32xf32, #tpu.memory_space<vmem>>, vector<20x32xf32>
    %cst_27 = arith.constant dense<0.000000e+00> : vector<20x256xf32>
    %82 = tpu.matmul %81, %80, %cst_27 {dimension_numbers = #tpu.dot_dimension_numbers<[1], [1], [0], [0], [0, 0, 1, 0], [], []>} : vector<20x32xf32>, vector<256x32xf32>, vector<20x256xf32> -> vector<20x256xf32>
    %cst_28 = arith.constant 0.000000e+00 : f32
    %83 = vector.broadcast %cst_28 : f32 to vector<20x256xf32>
    %84 = arith.cmpf oge, %82, %83 : vector<20x256xf32>
    %cst_29 = arith.constant 0.00999999977 : f32
    %85 = vector.broadcast %cst_29 : f32 to vector<20x256xf32>
    %86 = arith.mulf %85, %82 : vector<20x256xf32>
    %87 = arith.select %84, %82, %86 : vector<20x256xi1>, vector<20x256xf32>
    %88 = vector.extract_strided_slice %87 {offsets = [0, 0], sizes = [3, 256], strides = [1, 1]} : vector<20x256xf32> to vector<3x256xf32>
    %89 = vector.shape_cast %88 : vector<3x256xf32> to vector<1x3x256xf32>
    %c0_30 = arith.constant 0 : index
    %c0_31 = arith.constant 0 : index
    %c0_32 = arith.constant 0 : index
    %90 = vector.load %arg5[%c0_30, %c0_31, %c0_32] : memref<1x3x256xf32, #tpu.memory_space<vmem>>, vector<1x3x256xf32>
    tpu.vector_store %arg5[%c0_30, %c0_31, %c0_32], %89 {strides = array<i32>} : memref<1x3x256xf32, #tpu.memory_space<vmem>>, vector<1x3x256xf32>,
    %91 = vector.extract_strided_slice %87 {offsets = [8, 0], sizes = [12, 256], strides = [1, 1]} : vector<20x256xf32> to vector<12x256xf32>
    %92 = vector.shape_cast %91 : vector<12x256xf32> to vector<1x12x256xf32>
    %c0_33 = arith.constant 0 : index
    %c0_34 = arith.constant 0 : index
    %c0_35 = arith.constant 0 : index
    %93 = vector.load %arg6[%c0_33, %c0_34, %c0_35] : memref<1x12x256xf32, #tpu.memory_space<vmem>>, vector<1x12x256xf32>
    tpu.vector_store %arg6[%c0_33, %c0_34, %c0_35], %92 {strides = array<i32>} : memref<1x12x256xf32, #tpu.memory_space<vmem>>, vector<1x12x256xf32>,
    return
  }
  func.func @transform_0(%arg0: i32) -> (i32, i32, i32, i32) {
    %c0_i32 = arith.constant 0 : i32
    %c0_i32_0 = arith.constant 0 : i32
    %c0_i32_1 = arith.constant 0 : i32
    %c0_i32_2 = arith.constant 0 : i32
    return %arg0, %c0_i32, %c0_i32_0, %c0_i32_1 : i32, i32, i32, i32
  }
  func.func @transform_1(%arg0: i32) -> (i32, i32, i32) {
    %c0_i32 = arith.constant 0 : i32
    %c0_i32_0 = arith.constant 0 : i32
    %c0_i32_1 = arith.constant 0 : i32
    %c0_i32_2 = arith.constant 0 : i32
    return %c0_i32, %c0_i32_0, %c0_i32_1 : i32, i32, i32
  }
  func.func @transform_2(%arg0: i32) -> (i32, i32) {
    %c0_i32 = arith.constant 0 : i32
    %c0_i32_0 = arith.constant 0 : i32
    %c0_i32_1 = arith.constant 0 : i32
    return %c0_i32, %c0_i32_0 : i32, i32
  }
  func.func @transform_3(%arg0: i32) -> (i32, i32) {
    %c0_i32 = arith.constant 0 : i32
    %c0_i32_0 = arith.constant 0 : i32
    %c0_i32_1 = arith.constant 0 : i32
    return %c0_i32, %c0_i32_0 : i32, i32
  }
  func.func @transform_4(%arg0: i32) -> (i32, i32, i32) {
    %c0_i32 = arith.constant 0 : i32
    %c0_i32_0 = arith.constant 0 : i32
    %c0_i32_1 = arith.constant 0 : i32
    return %arg0, %c0_i32, %c0_i32_0 : i32, i32, i32
  }
  func.func @transform_5(%arg0: i32) -> (i32, i32, i32) {
    %c0_i32 = arith.constant 0 : i32
    %c0_i32_0 = arith.constant 0 : i32
    %c0_i32_1 = arith.constant 0 : i32
    return %arg0, %c0_i32, %c0_i32_0 : i32, i32, i32
  }
}

</mosaic_0001>

<llo_original>
// kernel: tpu_custom_call.1
$region0: #{tpu_custom_call.1}
  #allocation0 [shape = 'u32[]', space=smem, size = 0x4, offset = 0x4, fixed_abs, tag = 'smem constant byte address 0x4 - core index']
  #allocation1 [shape = 'u32[72,128]{1,0:T(1,128)}', space=vmem, size = 0x9000, scoped, tag = 'internal scratch']
  #allocation2 [shape = 'f32[18,18,32]{2,1,0:T(8,128)}', space=vmem, size = 0x36000, scoped, tag = 'scratch operand']
  %s0 = inlined_call_operand.hbm [shape: f32[2,16,16,32], index: 0, kind: input, shape index: {}]
  %s1 = inlined_call_operand.hbm [shape: f32[9,1,32], index: 1, kind: input, shape index: {}]
  %s2 = inlined_call_operand.vmem [shape: f32[1,32], index: 2, kind: input, shape index: {}]
  %s3 = inlined_call_operand.hbm [shape: f32[20,32], index: 3, kind: input, shape index: {}]
  %s4 = inlined_call_operand.vmem [shape: f32[2,3,256], index: 4, kind: output, shape index: {0}]
  %s5 = inlined_call_operand.vmem [shape: f32[2,12,256], index: 5, kind: output, shape index: {1}]
  %6 = xla_tuple %s4, %s5
  %s7 = sld [smem:[#allocation0]]
  $region69: #{tpu_custom_call.1} parent=0
    _
  %s9 = ssub.s32 1, %s7
  %s10 = scalar_select 0, %s9, %s7
  $region1: #{tpu_custom_call.1} parent=0
    #allocation3 [shape = 'u8[262144]{0}', space=vmem, size = 0x40000, scoped, tag = 'input window, operand 0']
    #allocation4 [shape = 's32[2]{0}', space=sflag, size = 0x8, scoped, tag = 'scoped memory for tpu_custom_call.1']
    #allocation5 [shape = 'u8[4608]{0}', space=vmem, size = 0x1400, scoped, tag = 'input window, operand 1, single buffered']
    #allocation6 [shape = 's32[1]{0}', space=sflag, size = 0x4, scoped, tag = 'scoped memory for tpu_custom_call.1']
    #allocation7 [shape = 'u8[12288]{0}', space=vmem, size = 0x3000, scoped, tag = 'input window, operand 3, single buffered']
    %11 = vsyncpa [#allocation4], 0
    %s12 = scalar_lea.sflag [#allocation4], 1
    %13 = vsyncpa %s12, 0
    %14 = vsyncpa [#allocation6], 0
    loop: start=0, step=1, limit=4
    $region2: #{tpu_custom_call.1} parent=1 // loop_pre_header
      _
    $region3: #{tpu_custom_call.1} parent=1 // loop_header
      %s16 = sphi 0, %s20
      %p17 = scmp.ge.s32.totalorder %s16, 4
      %s26 = sphi 0, %s28
      %s29 = sphi 0, %s26
      %s30 = sphi 0, %s29
      %s46 = sphi 0, %s30
      %s50 = sphi 0, %s50
      %s52 = sphi 0, %s50
      %s53 = sphi 0, %s52
      %s67 = sphi 0, %s53
      %s71 = sphi 0, %s71
      %s73 = sphi 0, %s71
      %s74 = sphi 0, %s73
      %s88 = sphi 0, %s74
      %s92 = sphi 0, %s92
      %s94 = sphi 0, %s92
      %s95 = sphi 0, %s94
      %s109 = sphi 0, %s95
      %s115 = sphi 0, %s117
      %s118 = sphi 0, %s115
      %s119 = sphi 0, %s118
      %s135 = sphi 0, %s119
      %s141 = sphi 0, %s143
      %s144 = sphi 0, %s141
      %s145 = sphi 0, %s144
      %s161 = sphi 0, %s145
    $region4: #{tpu_custom_call.1} parent=1 // loop_header_branch
      %19 = sbr.rel (%p17) target = $region8
    $region5: #{tpu_custom_call.1} parent=1 // loop_body
      %s21 = ssub.s32 %s16, 1
      %s22 = ssub.s32 %s16, 2
      %s23 = sadd.s32 %s16, 1
      %s24 = ssub.s32 %s16, %s23
      %p25 = scmp.eq.s32.totalorder %s24, 0
      %s27 = sadd.s32 %s26, 1
      %s28 = scalar_select %p25, %s26, %s27
      %p31 = pneg %p25
      %p32 = scmp.eq.s32.totalorder %s16, 1
      %p33 = por %p31, %p32
      %p34 = scmp.ne.s32.totalorder %s26, %s29
      %p35 = scmp.eq.s32.totalorder %s16, 0
      %p36 = por %p34, %p35
      %p37 = scmp.ne.s32.totalorder %s26, %s29
      %p38 = scmp.eq.s32.totalorder %s21, 1
      %p39 = por %p37, %p38
      %p40 = scmp.ne.s32.totalorder %s29, %s30
      %p41 = scmp.eq.s32.totalorder %s21, 0
      %p42 = por %p40, %p41
      %p43 = scmp.ne.s32.totalorder %s29, %s30
      %p44 = scmp.eq.s32.totalorder %s22, 1
      %p45 = por %p43, %p44
      %p47 = scmp.ne.s32.totalorder %s30, %s46
      %p48 = scmp.eq.s32.totalorder %s22, 0
      %p49 = por %p47, %p48
      %s51 = sadd.s32 %s50, 1
      %p54 = scmp.eq.s32.totalorder %s16, 1
      %p55 = scmp.ne.s32.totalorder %s50, %s52
      %p56 = scmp.eq.s32.totalorder %s16, 0
      %p57 = por %p55, %p56
      %p58 = scmp.ne.s32.totalorder %s50, %s52
      %p59 = scmp.eq.s32.totalorder %s21, 1
      %p60 = por %p58, %p59
      %p61 = scmp.ne.s32.totalorder %s52, %s53
      %p62 = scmp.eq.s32.totalorder %s21, 0
      %p63 = por %p61, %p62
      %p64 = scmp.ne.s32.totalorder %s52, %s53
      %p65 = scmp.eq.s32.totalorder %s22, 1
      %p66 = por %p64, %p65
      %p68 = scmp.ne.s32.totalorder %s53, %s67
      %p69 = scmp.eq.s32.totalorder %s22, 0
      %p70 = por %p68, %p69
      %s72 = sadd.s32 %s71, 1
      %p75 = scmp.eq.s32.totalorder %s16, 1
      %p76 = scmp.ne.s32.totalorder %s71, %s73
      %p77 = scmp.eq.s32.totalorder %s16, 0
      %p78 = por %p76, %p77
      %p79 = scmp.ne.s32.totalorder %s71, %s73
      %p80 = scmp.eq.s32.totalorder %s21, 1
      %p81 = por %p79, %p80
      %p82 = scmp.ne.s32.totalorder %s73, %s74
      %p83 = scmp.eq.s32.totalorder %s21, 0
      %p84 = por %p82, %p83
      %p85 = scmp.ne.s32.totalorder %s73, %s74
      %p86 = scmp.eq.s32.totalorder %s22, 1
      %p87 = por %p85, %p86
      %p89 = scmp.ne.s32.totalorder %s74, %s88
      %p90 = scmp.eq.s32.totalorder %s22, 0
      %p91 = por %p89, %p90
      %s93 = sadd.s32 %s92, 1
      %p96 = scmp.eq.s32.totalorder %s16, 1
      %p97 = scmp.ne.s32.totalorder %s92, %s94
      %p98 = scmp.eq.s32.totalorder %s16, 0
      %p99 = por %p97, %p98
      %p100 = scmp.ne.s32.totalorder %s92, %s94
      %p101 = scmp.eq.s32.totalorder %s21, 1
      %p102 = por %p100, %p101
      %p103 = scmp.ne.s32.totalorder %s94, %s95
      %p104 = scmp.eq.s32.totalorder %s21, 0
      %p105 = por %p103, %p104
      %p106 = scmp.ne.s32.totalorder %s94, %s95
      %p107 = scmp.eq.s32.totalorder %s22, 1
      %p108 = por %p106, %p107
      %p110 = scmp.ne.s32.totalorder %s95, %s109
      %p111 = scmp.eq.s32.totalorder %s22, 0
      %p112 = por %p110, %p111
      %s113 = ssub.s32 %s16, %s23
      %p114 = scmp.eq.s32.totalorder %s113, 0
      %s116 = sadd.s32 %s115, 1
      %s117 = scalar_select %p114, %s115, %s116
      %p120 = pneg %p114
      %p121 = scmp.eq.s32.totalorder %s16, 1
      %p122 = por %p120, %p121
      %p123 = scmp.ne.s32.totalorder %s115, %s118
      %p124 = scmp.eq.s32.totalorder %s16, 0
      %p125 = por %p123, %p124
      %p126 = scmp.ne.s32.totalorder %s115, %s118
      %p127 = scmp.eq.s32.totalorder %s21, 1
      %p128 = por %p126, %p127
      %p129 = scmp.ne.s32.totalorder %s118, %s119
      %p130 = scmp.eq.s32.totalorder %s21, 0
      %p131 = por %p129, %p130
      %p132 = scmp.ne.s32.totalorder %s118, %s119
      %p133 = scmp.eq.s32.totalorder %s22, 1
      %p134 = por %p132, %p133
      %p136 = scmp.ne.s32.totalorder %s119, %s135
      %p137 = scmp.eq.s32.totalorder %s22, 0
      %p138 = por %p136, %p137
      %s139 = ssub.s32 %s16, %s23
      %p140 = scmp.eq.s32.totalorder %s139, 0
      %s142 = sadd.s32 %s141, 1
      %s143 = scalar_select %p140, %s141, %s142
      %p146 = pneg %p140
      %p147 = scmp.eq.s32.totalorder %s16, 1
      %p148 = por %p146, %p147
      %p149 = scmp.ne.s32.totalorder %s141, %s144
      %p150 = scmp.eq.s32.totalorder %s16, 0
      %p151 = por %p149, %p150
      %p152 = scmp.ne.s32.totalorder %s141, %s144
      %p153 = scmp.eq.s32.totalorder %s21, 1
      %p154 = por %p152, %p153
      %p155 = scmp.ne.s32.totalorder %s144, %s145
      %p156 = scmp.eq.s32.totalorder %s21, 0
      %p157 = por %p155, %p156
      %p158 = scmp.ne.s32.totalorder %s144, %s145
      %p159 = scmp.eq.s32.totalorder %s22, 1
      %p160 = por %p158, %p159
      %p162 = scmp.ne.s32.totalorder %s145, %s161
      %p163 = scmp.eq.s32.totalorder %s22, 0
      %p164 = por %p162, %p163
      %p165 = scmp.le.s32.totalorder 1, %s16
      %p166 = scmp.lt.s32.totalorder %s16, 3
      %p167 = pnand %p165, %p166
      %p168 = pneg %p167
      // Predicated region
      $region9: #{tpu_custom_call.1} parent=5 // pred_check
        _
      $region10: #{tpu_custom_call.1} parent=5 // pred_check_branch
        %170 = sbr.rel (%p167) target = $region12
      $region11: #{tpu_custom_call.1} parent=5 // pred_region
        %s171 = ssub.s32 %s16, 1
        // Predicated region
        $region13: #{tpu_custom_call.1} parent=11 // pred_check
          %p172 = pneg %p63
        $region14: #{tpu_custom_call.1} parent=11 // pred_check_branch
          %174 = sbr.rel (%p172) target = $region16
        $region15: #{tpu_custom_call.1} parent=11 // pred_region
          %176 = vsyncadd [#allocation6], 0
          %s177 = sshll.u32 %s1, 4
          %s178 = int_to_ptr.hbm [resolvable:$true] %s177
          %s179 = sshll.u32 [#allocation5], 4
          %s180 = int_to_ptr.vmem [resolvable:$true] %s179
          %185 = dma.hbm_to_vmem [thread:$0]  %s178, 144, %s180, [#allocation6], 16, 16, 1
        $region16: #{tpu_custom_call.1} parent=11 // pred_fallthru
          _
        // Predicated region
        $region17: #{tpu_custom_call.1} parent=11 // pred_check
          %p186 = pneg %p84
        $region18: #{tpu_custom_call.1} parent=11 // pred_check_branch
          %188 = sbr.rel (%p186) target = $region20
        $region19: #{tpu_custom_call.1} parent=11 // pred_region
          _
        $region20: #{tpu_custom_call.1} parent=11 // pred_fallthru
          _
        // Predicated region
        $region21: #{tpu_custom_call.1} parent=11 // pred_check
          %p189 = pneg %p105
        $region22: #{tpu_custom_call.1} parent=11 // pred_check_branch
          %191 = sbr.rel (%p189) target = $region24
        $region23: #{tpu_custom_call.1} parent=11 // pred_region
          %193 = vsyncadd [#allocation6], 0
          %s194 = sshll.u32 %s3, 4
          %s195 = int_to_ptr.hbm [resolvable:$true] %s194
          %s196 = sshll.u32 [#allocation7], 4
          %s197 = int_to_ptr.vmem [resolvable:$true] %s196
          %202 = dma.hbm_to_vmem [thread:$0]  %s195, 384, %s197, [#allocation6], 128, 128, 8
        $region24: #{tpu_custom_call.1} parent=11 // pred_fallthru
          _
      $region12: #{tpu_custom_call.1} parent=5 // pred_fallthru
        _
      %p203 = scmp.lt.s32.totalorder %s16, 2
      // Predicated region
      $region25: #{tpu_custom_call.1} parent=5 // pred_check
        %p204 = pneg %p203
      $region26: #{tpu_custom_call.1} parent=5 // pred_check_branch
        %206 = sbr.rel (%p204) target = $region28
      $region27: #{tpu_custom_call.1} parent=5 // pred_region
        // Predicated region
        $region29: #{tpu_custom_call.1} parent=27 // pred_check
          %p207 = pneg %p36
        $region30: #{tpu_custom_call.1} parent=27 // pred_check_branch
          %209 = sbr.rel (%p207) target = $region32
        $region31: #{tpu_custom_call.1} parent=27 // pred_region
          %s210 = sand.u32 %s26, 1
          %s211 = scalar_lea.sflag [#allocation4], %s210
          %s212 = sand.u32 %s26, 1
          %s213 = smul.addr %s212, 256
          %s214 = scalar_lea.vmem [#allocation3], %s213
          %216 = vsyncadd %s211, 0
          %s217 = smul.addr %s16, 32
          %s218 = smul.addr %s217, 8
          %s219 = scalar_lea.hbm %s0, %s218
          %s220 = sshll.u32 %s219, 4
          %s221 = int_to_ptr.hbm [resolvable:$true] %s220
          %s222 = sshll.u32 %s214, 4
          %s223 = int_to_ptr.vmem [resolvable:$true] %s222
          %228 = dma.hbm_to_vmem [thread:$0]  %s221, 4096, %s223, %s211, 128, 128, 8
        $region32: #{tpu_custom_call.1} parent=27 // pred_fallthru
          _
      $region28: #{tpu_custom_call.1} parent=5 // pred_fallthru
        _
      %p229 = scmp.le.s32.totalorder 1, %s16
      %p230 = scmp.lt.s32.totalorder %s16, 3
      %p231 = pnand %p229, %p230
      %p232 = pneg %p231
      // Predicated region
      $region33: #{tpu_custom_call.1} parent=5 // pred_check
        _
      $region34: #{tpu_custom_call.1} parent=5 // pred_check_branch
        %234 = sbr.rel (%p231) target = $region36
      $region35: #{tpu_custom_call.1} parent=5 // pred_region
        %s235 = ssub.s32 %s16, 1
        %s236 = sand.u32 %s29, 1
        %s237 = scalar_lea.sflag [#allocation4], %s236
        %s238 = sand.u32 %s29, 1
        %s239 = smul.addr %s238, 256
        %s240 = scalar_lea.vmem [#allocation3], %s239
        // Predicated region
        $region37: #{tpu_custom_call.1} parent=35 // pred_check
          %p241 = pneg %p42
        $region38: #{tpu_custom_call.1} parent=35 // pred_check_branch
          %243 = sbr.rel (%p241) target = $region40
        $region39: #{tpu_custom_call.1} parent=35 // pred_region
          %245 = dma.done %s237, 4096
        $region40: #{tpu_custom_call.1} parent=35 // pred_fallthru
          _
        // Predicated region
        $region41: #{tpu_custom_call.1} parent=35 // pred_check
          %p246 = pneg %p63
        $region42: #{tpu_custom_call.1} parent=35 // pred_check_branch
          %248 = sbr.rel (%p246) target = $region44
        $region43: #{tpu_custom_call.1} parent=35 // pred_region
          %250 = dma.done [#allocation6], 144
        $region44: #{tpu_custom_call.1} parent=35 // pred_fallthru
          _
        // Predicated region
        $region45: #{tpu_custom_call.1} parent=35 // pred_check
          %p251 = pneg %p105
        $region46: #{tpu_custom_call.1} parent=35 // pred_check_branch
          %253 = sbr.rel (%p251) target = $region48
        $region47: #{tpu_custom_call.1} parent=35 // pred_region
          %255 = dma.done [#allocation6], 384
        $region48: #{tpu_custom_call.1} parent=35 // pred_fallthru
          _
        %s256 = sand.u32 %s29, 1
        %s257 = scalar_lea.sflag [#allocation4], %s256
        %s258 = sand.u32 %s29, 1
        %s259 = smul.addr %s258, 256
        %s260 = scalar_lea.vmem [#allocation3], %s259
        %p261 = pneg %p42
        %p262 = pneg %p39
        %p263 = pneg %p63
        %p264 = pneg %p60
        %p265 = pneg %p84
        %p266 = pneg %p81
        %p267 = pneg %p105
        %p268 = pneg %p102
        %p269 = pneg %p131
        %p270 = pneg %p128
        %p271 = scmp.lt.s32.totalorder %s21, 1
        %s272 = scalar_select %p271, %s21, 1
        %s273 = smul.addr %s272, 2
        %s274 = smul.addr %s273, 4
        %s275 = scalar_lea.vmem %s4, %s274
        %p276 = pneg %p157
        %p277 = pneg %p154
        %p278 = scmp.lt.s32.totalorder %s21, 1
        %s279 = scalar_select %p278, %s21, 1
        %s280 = smul.addr %s279, 4
        %s281 = smul.addr %s280, 8
        %s282 = scalar_lea.vmem %s5, %s281
        %p283 = scmp.lt.s32.totalorder %s21, 1
        %s284 = scalar_select %p283, %s21, 1
        %s285 = smul.addr %s284, 2
        %s286 = smul.addr %s285, 4
        %s287 = scalar_lea.vmem %s4, %s286
        %p288 = scmp.lt.s32.totalorder %s21, 1
        %s289 = scalar_select %p288, %s21, 1
        %s290 = smul.addr %s289, 4
        %s291 = smul.addr %s290, 8
        %s292 = scalar_lea.vmem %s5, %s291
        %vm293 = vcmask 261120
        %294 = vst.msk [vmem:[#allocation2] sm:$0xff] %vm293, 0.0
        %295 = vst.msk [vmem:[#allocation2 + $0x8] sm:$0xff] %vm293, 0.0
        %vm296 = vcmask 254976
        %297 = vst.msk [vmem:[#allocation2 + $0x10] sm:$0x3] %vm296, 0.0
        %s298 = scalar_lea.vmem [#allocation2], 408
        %299 = vst.msk [vmem:[%s298] sm:$0xff] %vm293, 0.0
        %300 = vst.msk [vmem:[%s298 + $0x8] sm:$0xff] %vm293, 0.0
        %301 = vst.msk [vmem:[%s298 + $0x10] sm:$0x3] %vm296, 0.0
        %s302 = scalar_lea.vmem [#allocation2], 24
        %vm303 = vcmask 253952
        %304 = vst.msk [vmem:[%s302] sm:$0x1] %vm303, 0.0
        %305 = vst.msk [vmem:[%s302 + $0x18] sm:$0x1] %vm303, 0.0
        %306 = vst.msk [vmem:[%s302 + $0x30] sm:$0x1] %vm303, 0.0
        %307 = vst.msk [vmem:[%s302 + $0x48] sm:$0x1] %vm303, 0.0
        %308 = vst.msk [vmem:[%s302 + $0x60] sm:$0x1] %vm303, 0.0
        %309 = vst.msk [vmem:[%s302 + $0x78] sm:$0x1] %vm303, 0.0
        %310 = vst.msk [vmem:[%s302 + $0x90] sm:$0x1] %vm303, 0.0
        %311 = vst.msk [vmem:[%s302 + $0xa8] sm:$0x1] %vm303, 0.0
        %312 = vst.msk [vmem:[%s302 + $0xc0] sm:$0x1] %vm303, 0.0
        %313 = vst.msk [vmem:[%s302 + $0xd8] sm:$0x1] %vm303, 0.0
        %314 = vst.msk [vmem:[%s302 + $0xf0] sm:$0x1] %vm303, 0.0
        %315 = vst.msk [vmem:[%s302 + $0x108] sm:$0x1] %vm303, 0.0
        %316 = vst.msk [vmem:[%s302 + $0x120] sm:$0x1] %vm303, 0.0
        %317 = vst.msk [vmem:[%s302 + $0x138] sm:$0x1] %vm303, 0.0
        %318 = vst.msk [vmem:[%s302 + $0x150] sm:$0x1] %vm303, 0.0
        %319 = vst.msk [vmem:[%s302 + $0x168] sm:$0x1] %vm303, 0.0
        %320 = vst.msk [vmem:[%s302 + $0x11] sm:$0x1] %vm303, 0.0
        %321 = vst.msk [vmem:[%s302 + $0x29] sm:$0x1] %vm303, 0.0
        %322 = vst.msk [vmem:[%s302 + $0x41] sm:$0x1] %vm303, 0.0
        %323 = vst.msk [vmem:[%s302 + $0x59] sm:$0x1] %vm303, 0.0
        %324 = vst.msk [vmem:[%s302 + $0x71] sm:$0x1] %vm303, 0.0
        %325 = vst.msk [vmem:[%s302 + $0x89] sm:$0x1] %vm303, 0.0
        %326 = vst.msk [vmem:[%s302 + $0xa1] sm:$0x1] %vm303, 0.0
        %327 = vst.msk [vmem:[%s302 + $0xb9] sm:$0x1] %vm303, 0.0
        %328 = vst.msk [vmem:[%s302 + $0xd1] sm:$0x1] %vm303, 0.0
        %329 = vst.msk [vmem:[%s302 + $0xe9] sm:$0x1] %vm303, 0.0
        %330 = vst.msk [vmem:[%s302 + $0x101] sm:$0x1] %vm303, 0.0
        %331 = vst.msk [vmem:[%s302 + $0x119] sm:$0x1] %vm303, 0.0
        %332 = vst.msk [vmem:[%s302 + $0x131] sm:$0x1] %vm303, 0.0
        %333 = vst.msk [vmem:[%s302 + $0x149] sm:$0x1] %vm303, 0.0
        %334 = vst.msk [vmem:[%s302 + $0x161] sm:$0x1] %vm303, 0.0
        %335 = vst.msk [vmem:[%s302 + $0x179] sm:$0x1] %vm303, 0.0
        %v336 = vld [vmem:[%s240] sm:$0xff]
        %v337 = vld [vmem:[%s240 + $0x8] sm:$0xff]
        %v338 = vld [vmem:[%s240 + $0x10] sm:$0xff]
        %v339 = vld [vmem:[%s240 + $0x18] sm:$0xff]
        %v340 = vld [vmem:[%s240 + $0x20] sm:$0xff]
        %v341 = vld [vmem:[%s240 + $0x28] sm:$0xff]
        %v342 = vld [vmem:[%s240 + $0x30] sm:$0xff]
        %v343 = vld [vmem:[%s240 + $0x38] sm:$0xff]
        %v344 = vld [vmem:[%s240 + $0x40] sm:$0xff]
        %v345 = vld [vmem:[%s240 + $0x48] sm:$0xff]
        %v346 = vld [vmem:[%s240 + $0x50] sm:$0xff]
        %v347 = vld [vmem:[%s240 + $0x58] sm:$0xff]
        %v348 = vld [vmem:[%s240 + $0x60] sm:$0xff]
        %v349 = vld [vmem:[%s240 + $0x68] sm:$0xff]
        %v350 = vld [vmem:[%s240 + $0x70] sm:$0xff]
        %v351 = vld [vmem:[%s240 + $0x78] sm:$0xff]
        %v352 = vld [vmem:[%s240 + $0x80] sm:$0xff]
        %v353 = vld [vmem:[%s240 + $0x88] sm:$0xff]
        %v354 = vld [vmem:[%s240 + $0x90] sm:$0xff]
        %v355 = vld [vmem:[%s240 + $0x98] sm:$0xff]
        %v356 = vld [vmem:[%s240 + $0xa0] sm:$0xff]
        %v357 = vld [vmem:[%s240 + $0xa8] sm:$0xff]
        %v358 = vld [vmem:[%s240 + $0xb0] sm:$0xff]
        %v359 = vld [vmem:[%s240 + $0xb8] sm:$0xff]
        %v360 = vld [vmem:[%s240 + $0xc0] sm:$0xff]
        %v361 = vld [vmem:[%s240 + $0xc8] sm:$0xff]
        %v362 = vld [vmem:[%s240 + $0xd0] sm:$0xff]
        %v363 = vld [vmem:[%s240 + $0xd8] sm:$0xff]
        %v364 = vld [vmem:[%s240 + $0xe0] sm:$0xff]
        %v365 = vld [vmem:[%s240 + $0xe8] sm:$0xff]
        %v366 = vld [vmem:[%s240 + $0xf0] sm:$0xff]
        %v367 = vld [vmem:[%s240 + $0xf8] sm:$0xff]
        %368 = vst.msk [vmem:[%s302 + $0x1] sm:$0xff] %vm293, %v336
        %369 = vst.msk [vmem:[%s302 + $0x9] sm:$0xff] %vm293, %v337
        %370 = vst.msk [vmem:[%s302 + $0x19] sm:$0xff] %vm293, %v338
        %371 = vst.msk [vmem:[%s302 + $0x21] sm:$0xff] %vm293, %v339
        %372 = vst.msk [vmem:[%s302 + $0x31] sm:$0xff] %vm293, %v340
        %373 = vst.msk [vmem:[%s302 + $0x39] sm:$0xff] %vm293, %v341
        %374 = vst.msk [vmem:[%s302 + $0x49] sm:$0xff] %vm293, %v342
        %375 = vst.msk [vmem:[%s302 + $0x51] sm:$0xff] %vm293, %v343
        %376 = vst.msk [vmem:[%s302 + $0x61] sm:$0xff] %vm293, %v344
        %377 = vst.msk [vmem:[%s302 + $0x69] sm:$0xff] %vm293, %v345
        %378 = vst.msk [vmem:[%s302 + $0x79] sm:$0xff] %vm293, %v346
        %379 = vst.msk [vmem:[%s302 + $0x81] sm:$0xff] %vm293, %v347
        %380 = vst.msk [vmem:[%s302 + $0x91] sm:$0xff] %vm293, %v348
        %381 = vst.msk [vmem:[%s302 + $0x99] sm:$0xff] %vm293, %v349
        %382 = vst.msk [vmem:[%s302 + $0xa9] sm:$0xff] %vm293, %v350
        %383 = vst.msk [vmem:[%s302 + $0xb1] sm:$0xff] %vm293, %v351
        %384 = vst.msk [vmem:[%s302 + $0xc1] sm:$0xff] %vm293, %v352
        %385 = vst.msk [vmem:[%s302 + $0xc9] sm:$0xff] %vm293, %v353
        %386 = vst.msk [vmem:[%s302 + $0xd9] sm:$0xff] %vm293, %v354
        %387 = vst.msk [vmem:[%s302 + $0xe1] sm:$0xff] %vm293, %v355
        %388 = vst.msk [vmem:[%s302 + $0xf1] sm:$0xff] %vm293, %v356
        %389 = vst.msk [vmem:[%s302 + $0xf9] sm:$0xff] %vm293, %v357
        %390 = vst.msk [vmem:[%s302 + $0x109] sm:$0xff] %vm293, %v358
        %391 = vst.msk [vmem:[%s302 + $0x111] sm:$0xff] %vm293, %v359
        %392 = vst.msk [vmem:[%s302 + $0x121] sm:$0xff] %vm293, %v360
        %393 = vst.msk [vmem:[%s302 + $0x129] sm:$0xff] %vm293, %v361
        %394 = vst.msk [vmem:[%s302 + $0x139] sm:$0xff] %vm293, %v362
        %395 = vst.msk [vmem:[%s302 + $0x141] sm:$0xff] %vm293, %v363
        %396 = vst.msk [vmem:[%s302 + $0x151] sm:$0xff] %vm293, %v364
        %397 = vst.msk [vmem:[%s302 + $0x159] sm:$0xff] %vm293, %v365
        %398 = vst.msk [vmem:[%s302 + $0x169] sm:$0xff] %vm293, %v366
        %399 = vst.msk [vmem:[%s302 + $0x171] sm:$0xff] %vm293, %v367
        %v400 = vld [vmem:[#allocation2] sm:$0xff]
        %v401 = vld [vmem:[#allocation2 + $0x8] sm:$0xff]
        %v402 = vld [vmem:[#allocation2 + $0x10] sm:$0x3]
        %v403 = vld [vmem:[#allocation2 + $0x18] sm:$0xff]
        %v404 = vld [vmem:[#allocation2 + $0x20] sm:$0xff]
        %v405 = vld [vmem:[#allocation2 + $0x28] sm:$0x3]
        %v406 = vld [vmem:[#allocation2 + $0x30] sm:$0xff]
        %v407 = vld [vmem:[#allocation2 + $0x38] sm:$0xff]
        %v408 = vld [vmem:[#allocation2 + $0x40] sm:$0x3]
        %v409 = vld [vmem:[#allocation2 + $0x48] sm:$0xff]
        %v410 = vld [vmem:[#allocation2 + $0x50] sm:$0xff]
        %v411 = vld [vmem:[#allocation2 + $0x58] sm:$0x3]
        %v412 = vld [vmem:[#allocation2 + $0x60] sm:$0xff]
        %v413 = vld [vmem:[#allocation2 + $0x68] sm:$0xff]
        %v414 = vld [vmem:[#allocation2 + $0x70] sm:$0x3]
        %v415 = vld [vmem:[#allocation2 + $0x78] sm:$0xff]
        %v416 = vld [vmem:[#allocation2 + $0x80] sm:$0xff]
        %v417 = vld [vmem:[#allocation2 + $0x88] sm:$0x3]
        %v418 = vld [vmem:[#allocation2 + $0x90] sm:$0xff]
        %v419 = vld [vmem:[#allocation2 + $0x98] sm:$0xff]
        %v420 = vld [vmem:[#allocation2 + $0xa0] sm:$0x3]
        %v421 = vld [vmem:[#allocation2 + $0xa8] sm:$0xff]
        %v422 = vld [vmem:[#allocation2 + $0xb0] sm:$0xff]
        %v423 = vld [vmem:[#allocation2 + $0xb8] sm:$0x3]
        %v424 = vld [vmem:[#allocation2 + $0xc0] sm:$0xff]
        %v425 = vld [vmem:[#allocation2 + $0xc8] sm:$0xff]
        %v426 = vld [vmem:[#allocation2 + $0xd0] sm:$0x3]
        %v427 = vld [vmem:[#allocation2 + $0xd8] sm:$0xff]
        %v428 = vld [vmem:[#allocation2 + $0xe0] sm:$0xff]
        %v429 = vld [vmem:[#allocation2 + $0xe8] sm:$0x3]
        %v430 = vld [vmem:[#allocation2 + $0xf0] sm:$0xff]
        %v431 = vld [vmem:[#allocation2 + $0xf8] sm:$0xff]
        %v432 = vld [vmem:[#allocation2 + $0x100] sm:$0x3]
        %v433 = vld [vmem:[#allocation2 + $0x108] sm:$0xff]
        %v434 = vld [vmem:[#allocation2 + $0x110] sm:$0xff]
        %v435 = vld [vmem:[#allocation2 + $0x118] sm:$0x3]
        %v436 = vld [vmem:[#allocation2 + $0x120] sm:$0xff]
        %v437 = vld [vmem:[#allocation2 + $0x128] sm:$0xff]
        %v438 = vld [vmem:[#allocation2 + $0x130] sm:$0x3]
        %v439 = vld [vmem:[#allocation2 + $0x138] sm:$0xff]
        %v440 = vld [vmem:[#allocation2 + $0x140] sm:$0xff]
        %v441 = vld [vmem:[#allocation2 + $0x148] sm:$0x3]
        %v442 = vld [vmem:[#allocation2 + $0x150] sm:$0xff]
        %v443 = vld [vmem:[#allocation2 + $0x158] sm:$0xff]
        %v444 = vld [vmem:[#allocation2 + $0x160] sm:$0x3]
        %v445 = vld [vmem:[#allocation2 + $0x168] sm:$0xff]
        %v446 = vld [vmem:[#allocation2 + $0x170] sm:$0xff]
        %v447 = vld [vmem:[#allocation2 + $0x178] sm:$0x3]
        %v448 = vld [vmem:[#allocation2 + $0x180] sm:$0xff]
        %v449 = vld [vmem:[#allocation2 + $0x188] sm:$0xff]
        %v450 = vld [vmem:[#allocation2 + $0x190] sm:$0x3]
        %v451 = vld [vmem:[#allocation2 + $0x198] sm:$0xff]
        %v452 = vld [vmem:[#allocation2 + $0x1a0] sm:$0xff]
        %v453 = vld [vmem:[#allocation2 + $0x1a8] sm:$0x3]
        %v454 = vld [vmem:[#allocation5] sm:$0x1]
        %v455 = vld [vmem:[#allocation5 + $0x1] sm:$0x1]
        %v456 = vld [vmem:[#allocation5 + $0x2] sm:$0x1]
        %v457 = vld [vmem:[#allocation5 + $0x3] sm:$0x1]
        %v458 = vld [vmem:[#allocation5 + $0x4] sm:$0x1]
        %v459 = vld [vmem:[#allocation5 + $0x5] sm:$0x1]
        %v460 = vld [vmem:[#allocation5 + $0x6] sm:$0x1]
        %v461 = vld [vmem:[#allocation5 + $0x7] sm:$0x1]
        %v462 = vld [vmem:[#allocation5 + $0x8] sm:$0x1]
        %v464 = vperm.slane %v454, 0
        %v466 = vmul.f32 %v400, %v464
        %v467 = vmul.f32 %v401, %v464
        %v468 = vmul.f32 %v403, %v464
        %v469 = vmul.f32 %v404, %v464
        %v470 = vmul.f32 %v406, %v464
        %v471 = vmul.f32 %v407, %v464
        %v472 = vmul.f32 %v409, %v464
        %v473 = vmul.f32 %v410, %v464
        %v474 = vmul.f32 %v412, %v464
        %v475 = vmul.f32 %v413, %v464
        %v476 = vmul.f32 %v415, %v464
        %v477 = vmul.f32 %v416, %v464
        %v478 = vmul.f32 %v418, %v464
        %v479 = vmul.f32 %v419, %v464
        %v480 = vmul.f32 %v421, %v464
        %v481 = vmul.f32 %v422, %v464
        %v482 = vmul.f32 %v424, %v464
        %v483 = vmul.f32 %v425, %v464
        %v484 = vmul.f32 %v427, %v464
        %v485 = vmul.f32 %v428, %v464
        %v486 = vmul.f32 %v430, %v464
        %v487 = vmul.f32 %v431, %v464
        %v488 = vmul.f32 %v433, %v464
        %v489 = vmul.f32 %v434, %v464
        %v490 = vmul.f32 %v436, %v464
        %v491 = vmul.f32 %v437, %v464
        %v492 = vmul.f32 %v439, %v464
        %v493 = vmul.f32 %v440, %v464
        %v494 = vmul.f32 %v442, %v464
        %v495 = vmul.f32 %v443, %v464
        %v496 = vmul.f32 %v445, %v464
        %v497 = vmul.f32 %v446, %v464
        %v498 = vld [vmem:[%s2] sm:$0x1]
        %v500 = vperm.slane %v498, 0
        %v502 = vadd.f32 %v466, %v500
        %v503 = vadd.f32 %v467, %v500
        %v504 = vadd.f32 %v468, %v500
        %v505 = vadd.f32 %v469, %v500
        %v506 = vadd.f32 %v470, %v500
        %v507 = vadd.f32 %v471, %v500
        %v508 = vadd.f32 %v472, %v500
        %v509 = vadd.f32 %v473, %v500
        %v510 = vadd.f32 %v474, %v500
        %v511 = vadd.f32 %v475, %v500
        %v512 = vadd.f32 %v476, %v500
        %v513 = vadd.f32 %v477, %v500
        %v514 = vadd.f32 %v478, %v500
        %v515 = vadd.f32 %v479, %v500
        %v516 = vadd.f32 %v480, %v500
        %v517 = vadd.f32 %v481, %v500
        %v518 = vadd.f32 %v482, %v500
        %v519 = vadd.f32 %v483, %v500
        %v520 = vadd.f32 %v484, %v500
        %v521 = vadd.f32 %v485, %v500
        %v522 = vadd.f32 %v486, %v500
        %v523 = vadd.f32 %v487, %v500
        %v524 = vadd.f32 %v488, %v500
        %v525 = vadd.f32 %v489, %v500
        %v526 = vadd.f32 %v490, %v500
        %v527 = vadd.f32 %v491, %v500
        %v528 = vadd.f32 %v492, %v500
        %v529 = vadd.f32 %v493, %v500
        %v530 = vadd.f32 %v494, %v500
        %v531 = vadd.f32 %v495, %v500
        %v532 = vadd.f32 %v496, %v500
        %v533 = vadd.f32 %v497, %v500
        %v535 = vperm.slane %v455, 0
        %v537 = vmul.f32 %v400, %v535
        %v538 = vmul.f32 %v401, %v535
        %v539 = vmul.f32 %v402, %v535
        %v540 = vmul.f32 %v403, %v535
        %v541 = vmul.f32 %v404, %v535
        %v542 = vmul.f32 %v405, %v535
        %v543 = vmul.f32 %v406, %v535
        %v544 = vmul.f32 %v407, %v535
        %v545 = vmul.f32 %v408, %v535
        %v546 = vmul.f32 %v409, %v535
        %v547 = vmul.f32 %v410, %v535
        %v548 = vmul.f32 %v411, %v535
        %v549 = vmul.f32 %v412, %v535
        %v550 = vmul.f32 %v413, %v535
        %v551 = vmul.f32 %v414, %v535
        %v552 = vmul.f32 %v415, %v535
        %v553 = vmul.f32 %v416, %v535
        %v554 = vmul.f32 %v417, %v535
        %v555 = vmul.f32 %v418, %v535
        %v556 = vmul.f32 %v419, %v535
        %v557 = vmul.f32 %v420, %v535
        %v558 = vmul.f32 %v421, %v535
        %v559 = vmul.f32 %v422, %v535
        %v560 = vmul.f32 %v423, %v535
        %v561 = vmul.f32 %v424, %v535
        %v562 = vmul.f32 %v425, %v535
        %v563 = vmul.f32 %v426, %v535
        %v564 = vmul.f32 %v427, %v535
        %v565 = vmul.f32 %v428, %v535
        %v566 = vmul.f32 %v429, %v535
        %v567 = vmul.f32 %v430, %v535
        %v568 = vmul.f32 %v431, %v535
        %v569 = vmul.f32 %v432, %v535
        %v570 = vmul.f32 %v433, %v535
        %v571 = vmul.f32 %v434, %v535
        %v572 = vmul.f32 %v435, %v535
        %v573 = vmul.f32 %v436, %v535
        %v574 = vmul.f32 %v437, %v535
        %v575 = vmul.f32 %v438, %v535
        %v576 = vmul.f32 %v439, %v535
        %v577 = vmul.f32 %v440, %v535
        %v578 = vmul.f32 %v441, %v535
        %v579 = vmul.f32 %v442, %v535
        %v580 = vmul.f32 %v443, %v535
        %v581 = vmul.f32 %v444, %v535
        %v582 = vmul.f32 %v445, %v535
        %v583 = vmul.f32 %v446, %v535
        %v584 = vmul.f32 %v447, %v535
        %vm633 = vcmask 1046528
        %v634 = vrot.slane %v537, 1
        %v635 = vrot.slane %v538, 1
        %v636 = vsel %vm633, %v634, %v635
        %v637 = vrot.slane %v539, 1
        %v638 = vsel %vm633, %v635, %v637
        %v639 = vrot.slane %v540, 1
        %v640 = vrot.slane %v541, 1
        %v641 = vsel %vm633, %v639, %v640
        %v642 = vrot.slane %v542, 1
        %v643 = vsel %vm633, %v640, %v642
        %v644 = vrot.slane %v543, 1
        %v645 = vrot.slane %v544, 1
        %v646 = vsel %vm633, %v644, %v645
        %v647 = vrot.slane %v545, 1
        %v648 = vsel %vm633, %v645, %v647
        %v649 = vrot.slane %v546, 1
        %v650 = vrot.slane %v547, 1
        %v651 = vsel %vm633, %v649, %v650
        %v652 = vrot.slane %v548, 1
        %v653 = vsel %vm633, %v650, %v652
        %v654 = vrot.slane %v549, 1
        %v655 = vrot.slane %v550, 1
        %v656 = vsel %vm633, %v654, %v655
        %v657 = vrot.slane %v551, 1
        %v658 = vsel %vm633, %v655, %v657
        %v659 = vrot.slane %v552, 1
        %v660 = vrot.slane %v553, 1
        %v661 = vsel %vm633, %v659, %v660
        %v662 = vrot.slane %v554, 1
        %v663 = vsel %vm633, %v660, %v662
        %v664 = vrot.slane %v555, 1
        %v665 = vrot.slane %v556, 1
        %v666 = vsel %vm633, %v664, %v665
        %v667 = vrot.slane %v557, 1
        %v668 = vsel %vm633, %v665, %v667
        %v669 = vrot.slane %v558, 1
        %v670 = vrot.slane %v559, 1
        %v671 = vsel %vm633, %v669, %v670
        %v672 = vrot.slane %v560, 1
        %v673 = vsel %vm633, %v670, %v672
        %v674 = vrot.slane %v561, 1
        %v675 = vrot.slane %v562, 1
        %v676 = vsel %vm633, %v674, %v675
        %v677 = vrot.slane %v563, 1
        %v678 = vsel %vm633, %v675, %v677
        %v679 = vrot.slane %v564, 1
        %v680 = vrot.slane %v565, 1
        %v681 = vsel %vm633, %v679, %v680
        %v682 = vrot.slane %v566, 1
        %v683 = vsel %vm633, %v680, %v682
        %v684 = vrot.slane %v567, 1
        %v685 = vrot.slane %v568, 1
        %v686 = vsel %vm633, %v684, %v685
        %v687 = vrot.slane %v569, 1
        %v688 = vsel %vm633, %v685, %v687
        %v689 = vrot.slane %v570, 1
        %v690 = vrot.slane %v571, 1
        %v691 = vsel %vm633, %v689, %v690
        %v692 = vrot.slane %v572, 1
        %v693 = vsel %vm633, %v690, %v692
        %v694 = vrot.slane %v573, 1
        %v695 = vrot.slane %v574, 1
        %v696 = vsel %vm633, %v694, %v695
        %v697 = vrot.slane %v575, 1
        %v698 = vsel %vm633, %v695, %v697
        %v699 = vrot.slane %v576, 1
        %v700 = vrot.slane %v577, 1
        %v701 = vsel %vm633, %v699, %v700
        %v702 = vrot.slane %v578, 1
        %v703 = vsel %vm633, %v700, %v702
        %v704 = vrot.slane %v579, 1
        %v705 = vrot.slane %v580, 1
        %v706 = vsel %vm633, %v704, %v705
        %v707 = vrot.slane %v581, 1
        %v708 = vsel %vm633, %v705, %v707
        %v709 = vrot.slane %v582, 1
        %v710 = vrot.slane %v583, 1
        %v711 = vsel %vm633, %v709, %v710
        %v712 = vrot.slane %v584, 1
        %v713 = vsel %vm633, %v710, %v712
        %v746 = vadd.f32 %v502, %v636
        %v747 = vadd.f32 %v503, %v638
        %v748 = vadd.f32 %v504, %v641
        %v749 = vadd.f32 %v505, %v643
        %v750 = vadd.f32 %v506, %v646
        %v751 = vadd.f32 %v507, %v648
        %v752 = vadd.f32 %v508, %v651
        %v753 = vadd.f32 %v509, %v653
        %v754 = vadd.f32 %v510, %v656
        %v755 = vadd.f32 %v511, %v658
        %v756 = vadd.f32 %v512, %v661
        %v757 = vadd.f32 %v513, %v663
        %v758 = vadd.f32 %v514, %v666
        %v759 = vadd.f32 %v515, %v668
        %v760 = vadd.f32 %v516, %v671
        %v761 = vadd.f32 %v517, %v673
        %v762 = vadd.f32 %v518, %v676
        %v763 = vadd.f32 %v519, %v678
        %v764 = vadd.f32 %v520, %v681
        %v765 = vadd.f32 %v521, %v683
        %v766 = vadd.f32 %v522, %v686
        %v767 = vadd.f32 %v523, %v688
        %v768 = vadd.f32 %v524, %v691
        %v769 = vadd.f32 %v525, %v693
        %v770 = vadd.f32 %v526, %v696
        %v771 = vadd.f32 %v527, %v698
        %v772 = vadd.f32 %v528, %v701
        %v773 = vadd.f32 %v529, %v703
        %v774 = vadd.f32 %v530, %v706
        %v775 = vadd.f32 %v531, %v708
        %v776 = vadd.f32 %v532, %v711
        %v777 = vadd.f32 %v533, %v713
        %v779 = vperm.slane %v456, 0
        %v781 = vmul.f32 %v400, %v779
        %v782 = vmul.f32 %v401, %v779
        %v783 = vmul.f32 %v402, %v779
        %v784 = vmul.f32 %v403, %v779
        %v785 = vmul.f32 %v404, %v779
        %v786 = vmul.f32 %v405, %v779
        %v787 = vmul.f32 %v406, %v779
        %v788 = vmul.f32 %v407, %v779
        %v789 = vmul.f32 %v408, %v779
        %v790 = vmul.f32 %v409, %v779
        %v791 = vmul.f32 %v410, %v779
        %v792 = vmul.f32 %v411, %v779
        %v793 = vmul.f32 %v412, %v779
        %v794 = vmul.f32 %v413, %v779
        %v795 = vmul.f32 %v414, %v779
        %v796 = vmul.f32 %v415, %v779
        %v797 = vmul.f32 %v416, %v779
        %v798 = vmul.f32 %v417, %v779
        %v799 = vmul.f32 %v418, %v779
        %v800 = vmul.f32 %v419, %v779
        %v801 = vmul.f32 %v420, %v779
        %v802 = vmul.f32 %v421, %v779
        %v803 = vmul.f32 %v422, %v779
        %v804 = vmul.f32 %v423, %v779
        %v805 = vmul.f32 %v424, %v779
        %v806 = vmul.f32 %v425, %v779
        %v807 = vmul.f32 %v426, %v779
        %v808 = vmul.f32 %v427, %v779
        %v809 = vmul.f32 %v428, %v779
        %v810 = vmul.f32 %v429, %v779
        %v811 = vmul.f32 %v430, %v779
        %v812 = vmul.f32 %v431, %v779
        %v813 = vmul.f32 %v432, %v779
        %v814 = vmul.f32 %v433, %v779
        %v815 = vmul.f32 %v434, %v779
        %v816 = vmul.f32 %v435, %v779
        %v817 = vmul.f32 %v436, %v779
        %v818 = vmul.f32 %v437, %v779
        %v819 = vmul.f32 %v438, %v779
        %v820 = vmul.f32 %v439, %v779
        %v821 = vmul.f32 %v440, %v779
        %v822 = vmul.f32 %v441, %v779
        %v823 = vmul.f32 %v442, %v779
        %v824 = vmul.f32 %v443, %v779
        %v825 = vmul.f32 %v444, %v779
        %v826 = vmul.f32 %v445, %v779
        %v827 = vmul.f32 %v446, %v779
        %v828 = vmul.f32 %v447, %v779
        %vm877 = vcmask 1045504
        %v878 = vrot.slane %v781, 2
        %v879 = vrot.slane %v782, 2
        %v880 = vsel %vm877, %v878, %v879
        %v881 = vrot.slane %v783, 2
        %v882 = vsel %vm877, %v879, %v881
        %v883 = vrot.slane %v784, 2
        %v884 = vrot.slane %v785, 2
        %v885 = vsel %vm877, %v883, %v884
        %v886 = vrot.slane %v786, 2
        %v887 = vsel %vm877, %v884, %v886
        %v888 = vrot.slane %v787, 2
        %v889 = vrot.slane %v788, 2
        %v890 = vsel %vm877, %v888, %v889
        %v891 = vrot.slane %v789, 2
        %v892 = vsel %vm877, %v889, %v891
        %v893 = vrot.slane %v790, 2
        %v894 = vrot.slane %v791, 2
        %v895 = vsel %vm877, %v893, %v894
        %v896 = vrot.slane %v792, 2
        %v897 = vsel %vm877, %v894, %v896
        %v898 = vrot.slane %v793, 2
        %v899 = vrot.slane %v794, 2
        %v900 = vsel %vm877, %v898, %v899
        %v901 = vrot.slane %v795, 2
        %v902 = vsel %vm877, %v899, %v901
        %v903 = vrot.slane %v796, 2
        %v904 = vrot.slane %v797, 2
        %v905 = vsel %vm877, %v903, %v904
        %v906 = vrot.slane %v798, 2
        %v907 = vsel %vm877, %v904, %v906
        %v908 = vrot.slane %v799, 2
        %v909 = vrot.slane %v800, 2
        %v910 = vsel %vm877, %v908, %v909
        %v911 = vrot.slane %v801, 2
        %v912 = vsel %vm877, %v909, %v911
        %v913 = vrot.slane %v802, 2
        %v914 = vrot.slane %v803, 2
        %v915 = vsel %vm877, %v913, %v914
        %v916 = vrot.slane %v804, 2
        %v917 = vsel %vm877, %v914, %v916
        %v918 = vrot.slane %v805, 2
        %v919 = vrot.slane %v806, 2
        %v920 = vsel %vm877, %v918, %v919
        %v921 = vrot.slane %v807, 2
        %v922 = vsel %vm877, %v919, %v921
        %v923 = vrot.slane %v808, 2
        %v924 = vrot.slane %v809, 2
        %v925 = vsel %vm877, %v923, %v924
        %v926 = vrot.slane %v810, 2
        %v927 = vsel %vm877, %v924, %v926
        %v928 = vrot.slane %v811, 2
        %v929 = vrot.slane %v812, 2
        %v930 = vsel %vm877, %v928, %v929
        %v931 = vrot.slane %v813, 2
        %v932 = vsel %vm877, %v929, %v931
        %v933 = vrot.slane %v814, 2
        %v934 = vrot.slane %v815, 2
        %v935 = vsel %vm877, %v933, %v934
        %v936 = vrot.slane %v816, 2
        %v937 = vsel %vm877, %v934, %v936
        %v938 = vrot.slane %v817, 2
        %v939 = vrot.slane %v818, 2
        %v940 = vsel %vm877, %v938, %v939
        %v941 = vrot.slane %v819, 2
        %v942 = vsel %vm877, %v939, %v941
        %v943 = vrot.slane %v820, 2
        %v944 = vrot.slane %v821, 2
        %v945 = vsel %vm877, %v943, %v944
        %v946 = vrot.slane %v822, 2
        %v947 = vsel %vm877, %v944, %v946
        %v948 = vrot.slane %v823, 2
        %v949 = vrot.slane %v824, 2
        %v950 = vsel %vm877, %v948, %v949
        %v951 = vrot.slane %v825, 2
        %v952 = vsel %vm877, %v949, %v951
        %v953 = vrot.slane %v826, 2
        %v954 = vrot.slane %v827, 2
        %v955 = vsel %vm877, %v953, %v954
        %v956 = vrot.slane %v828, 2
        %v957 = vsel %vm877, %v954, %v956
        %v990 = vadd.f32 %v746, %v880
        %v991 = vadd.f32 %v747, %v882
        %v992 = vadd.f32 %v748, %v885
        %v993 = vadd.f32 %v749, %v887
        %v994 = vadd.f32 %v750, %v890
        %v995 = vadd.f32 %v751, %v892
        %v996 = vadd.f32 %v752, %v895
        %v997 = vadd.f32 %v753, %v897
        %v998 = vadd.f32 %v754, %v900
        %v999 = vadd.f32 %v755, %v902
        %v1000 = vadd.f32 %v756, %v905
        %v1001 = vadd.f32 %v757, %v907
        %v1002 = vadd.f32 %v758, %v910
        %v1003 = vadd.f32 %v759, %v912
        %v1004 = vadd.f32 %v760, %v915
        %v1005 = vadd.f32 %v761, %v917
        %v1006 = vadd.f32 %v762, %v920
        %v1007 = vadd.f32 %v763, %v922
        %v1008 = vadd.f32 %v764, %v925
        %v1009 = vadd.f32 %v765, %v927
        %v1010 = vadd.f32 %v766, %v930
        %v1011 = vadd.f32 %v767, %v932
        %v1012 = vadd.f32 %v768, %v935
        %v1013 = vadd.f32 %v769, %v937
        %v1014 = vadd.f32 %v770, %v940
        %v1015 = vadd.f32 %v771, %v942
        %v1016 = vadd.f32 %v772, %v945
        %v1017 = vadd.f32 %v773, %v947
        %v1018 = vadd.f32 %v774, %v950
        %v1019 = vadd.f32 %v775, %v952
        %v1020 = vadd.f32 %v776, %v955
        %v1021 = vadd.f32 %v777, %v957
        %v1023 = vperm.slane %v457, 0
        %v1025 = vmul.f32 %v403, %v1023
        %v1026 = vmul.f32 %v404, %v1023
        %v1027 = vmul.f32 %v406, %v1023
        %v1028 = vmul.f32 %v407, %v1023
        %v1029 = vmul.f32 %v409, %v1023
        %v1030 = vmul.f32 %v410, %v1023
        %v1031 = vmul.f32 %v412, %v1023
        %v1032 = vmul.f32 %v413, %v1023
        %v1033 = vmul.f32 %v415, %v1023
        %v1034 = vmul.f32 %v416, %v1023
        %v1035 = vmul.f32 %v418, %v1023
        %v1036 = vmul.f32 %v419, %v1023
        %v1037 = vmul.f32 %v421, %v1023
        %v1038 = vmul.f32 %v422, %v1023
        %v1039 = vmul.f32 %v424, %v1023
        %v1040 = vmul.f32 %v425, %v1023
        %v1041 = vmul.f32 %v427, %v1023
        %v1042 = vmul.f32 %v428, %v1023
        %v1043 = vmul.f32 %v430, %v1023
        %v1044 = vmul.f32 %v431, %v1023
        %v1045 = vmul.f32 %v433, %v1023
        %v1046 = vmul.f32 %v434, %v1023
        %v1047 = vmul.f32 %v436, %v1023
        %v1048 = vmul.f32 %v437, %v1023
        %v1049 = vmul.f32 %v439, %v1023
        %v1050 = vmul.f32 %v440, %v1023
        %v1051 = vmul.f32 %v442, %v1023
        %v1052 = vmul.f32 %v443, %v1023
        %v1053 = vmul.f32 %v445, %v1023
        %v1054 = vmul.f32 %v446, %v1023
        %v1055 = vmul.f32 %v448, %v1023
        %v1056 = vmul.f32 %v449, %v1023
        %v1057 = vadd.f32 %v990, %v1025
        %v1058 = vadd.f32 %v991, %v1026
        %v1059 = vadd.f32 %v992, %v1027
        %v1060 = vadd.f32 %v993, %v1028
        %v1061 = vadd.f32 %v994, %v1029
        %v1062 = vadd.f32 %v995, %v1030
        %v1063 = vadd.f32 %v996, %v1031
        %v1064 = vadd.f32 %v997, %v1032
        %v1065 = vadd.f32 %v998, %v1033
        %v1066 = vadd.f32 %v999, %v1034
        %v1067 = vadd.f32 %v1000, %v1035
        %v1068 = vadd.f32 %v1001, %v1036
        %v1069 = vadd.f32 %v1002, %v1037
        %v1070 = vadd.f32 %v1003, %v1038
        %v1071 = vadd.f32 %v1004, %v1039
        %v1072 = vadd.f32 %v1005, %v1040
        %v1073 = vadd.f32 %v1006, %v1041
        %v1074 = vadd.f32 %v1007, %v1042
        %v1075 = vadd.f32 %v1008, %v1043
        %v1076 = vadd.f32 %v1009, %v1044
        %v1077 = vadd.f32 %v1010, %v1045
        %v1078 = vadd.f32 %v1011, %v1046
        %v1079 = vadd.f32 %v1012, %v1047
        %v1080 = vadd.f32 %v1013, %v1048
        %v1081 = vadd.f32 %v1014, %v1049
        %v1082 = vadd.f32 %v1015, %v1050
        %v1083 = vadd.f32 %v1016, %v1051
        %v1084 = vadd.f32 %v1017, %v1052
        %v1085 = vadd.f32 %v1018, %v1053
        %v1086 = vadd.f32 %v1019, %v1054
        %v1087 = vadd.f32 %v1020, %v1055
        %v1088 = vadd.f32 %v1021, %v1056
        %v1090 = vperm.slane %v458, 0
        %v1092 = vmul.f32 %v403, %v1090
        %v1093 = vmul.f32 %v404, %v1090
        %v1094 = vmul.f32 %v405, %v1090
        %v1095 = vmul.f32 %v406, %v1090
        %v1096 = vmul.f32 %v407, %v1090
        %v1097 = vmul.f32 %v408, %v1090
        %v1098 = vmul.f32 %v409, %v1090
        %v1099 = vmul.f32 %v410, %v1090
        %v1100 = vmul.f32 %v411, %v1090
        %v1101 = vmul.f32 %v412, %v1090
        %v1102 = vmul.f32 %v413, %v1090
        %v1103 = vmul.f32 %v414, %v1090
        %v1104 = vmul.f32 %v415, %v1090
        %v1105 = vmul.f32 %v416, %v1090
        %v1106 = vmul.f32 %v417, %v1090
        %v1107 = vmul.f32 %v418, %v1090
        %v1108 = vmul.f32 %v419, %v1090
        %v1109 = vmul.f32 %v420, %v1090
        %v1110 = vmul.f32 %v421, %v1090
        %v1111 = vmul.f32 %v422, %v1090
        %v1112 = vmul.f32 %v423, %v1090
        %v1113 = vmul.f32 %v424, %v1090
        %v1114 = vmul.f32 %v425, %v1090
        %v1115 = vmul.f32 %v426, %v1090
        %v1116 = vmul.f32 %v427, %v1090
        %v1117 = vmul.f32 %v428, %v1090
        %v1118 = vmul.f32 %v429, %v1090
        %v1119 = vmul.f32 %v430, %v1090
        %v1120 = vmul.f32 %v431, %v1090
        %v1121 = vmul.f32 %v432, %v1090
        %v1122 = vmul.f32 %v433, %v1090
        %v1123 = vmul.f32 %v434, %v1090
        %v1124 = vmul.f32 %v435, %v1090
        %v1125 = vmul.f32 %v436, %v1090
        %v1126 = vmul.f32 %v437, %v1090
        %v1127 = vmul.f32 %v438, %v1090
        %v1128 = vmul.f32 %v439, %v1090
        %v1129 = vmul.f32 %v440, %v1090
        %v1130 = vmul.f32 %v441, %v1090
        %v1131 = vmul.f32 %v442, %v1090
        %v1132 = vmul.f32 %v443, %v1090
        %v1133 = vmul.f32 %v444, %v1090
        %v1134 = vmul.f32 %v445, %v1090
        %v1135 = vmul.f32 %v446, %v1090
        %v1136 = vmul.f32 %v447, %v1090
        %v1137 = vmul.f32 %v448, %v1090
        %v1138 = vmul.f32 %v449, %v1090
        %v1139 = vmul.f32 %v450, %v1090
        %v1188 = vrot.slane %v1092, 1
        %v1189 = vrot.slane %v1093, 1
        %v1190 = vsel %vm633, %v1188, %v1189
        %v1191 = vrot.slane %v1094, 1
        %v1192 = vsel %vm633, %v1189, %v1191
        %v1193 = vrot.slane %v1095, 1
        %v1194 = vrot.slane %v1096, 1
        %v1195 = vsel %vm633, %v1193, %v1194
        %v1196 = vrot.slane %v1097, 1
        %v1197 = vsel %vm633, %v1194, %v1196
        %v1198 = vrot.slane %v1098, 1
        %v1199 = vrot.slane %v1099, 1
        %v1200 = vsel %vm633, %v1198, %v1199
        %v1201 = vrot.slane %v1100, 1
        %v1202 = vsel %vm633, %v1199, %v1201
        %v1203 = vrot.slane %v1101, 1
        %v1204 = vrot.slane %v1102, 1
        %v1205 = vsel %vm633, %v1203, %v1204
        %v1206 = vrot.slane %v1103, 1
        %v1207 = vsel %vm633, %v1204, %v1206
        %v1208 = vrot.slane %v1104, 1
        %v1209 = vrot.slane %v1105, 1
        %v1210 = vsel %vm633, %v1208, %v1209
        %v1211 = vrot.slane %v1106, 1
        %v1212 = vsel %vm633, %v1209, %v1211
        %v1213 = vrot.slane %v1107, 1
        %v1214 = vrot.slane %v1108, 1
        %v1215 = vsel %vm633, %v1213, %v1214
        %v1216 = vrot.slane %v1109, 1
        %v1217 = vsel %vm633, %v1214, %v1216
        %v1218 = vrot.slane %v1110, 1
        %v1219 = vrot.slane %v1111, 1
        %v1220 = vsel %vm633, %v1218, %v1219
        %v1221 = vrot.slane %v1112, 1
        %v1222 = vsel %vm633, %v1219, %v1221
        %v1223 = vrot.slane %v1113, 1
        %v1224 = vrot.slane %v1114, 1
        %v1225 = vsel %vm633, %v1223, %v1224
        %v1226 = vrot.slane %v1115, 1
        %v1227 = vsel %vm633, %v1224, %v1226
        %v1228 = vrot.slane %v1116, 1
        %v1229 = vrot.slane %v1117, 1
        %v1230 = vsel %vm633, %v1228, %v1229
        %v1231 = vrot.slane %v1118, 1
        %v1232 = vsel %vm633, %v1229, %v1231
        %v1233 = vrot.slane %v1119, 1
        %v1234 = vrot.slane %v1120, 1
        %v1235 = vsel %vm633, %v1233, %v1234
        %v1236 = vrot.slane %v1121, 1
        %v1237 = vsel %vm633, %v1234, %v1236
        %v1238 = vrot.slane %v1122, 1
        %v1239 = vrot.slane %v1123, 1
        %v1240 = vsel %vm633, %v1238, %v1239
        %v1241 = vrot.slane %v1124, 1
        %v1242 = vsel %vm633, %v1239, %v1241
        %v1243 = vrot.slane %v1125, 1
        %v1244 = vrot.slane %v1126, 1
        %v1245 = vsel %vm633, %v1243, %v1244
        %v1246 = vrot.slane %v1127, 1
        %v1247 = vsel %vm633, %v1244, %v1246
        %v1248 = vrot.slane %v1128, 1
        %v1249 = vrot.slane %v1129, 1
        %v1250 = vsel %vm633, %v1248, %v1249
        %v1251 = vrot.slane %v1130, 1
        %v1252 = vsel %vm633, %v1249, %v1251
        %v1253 = vrot.slane %v1131, 1
        %v1254 = vrot.slane %v1132, 1
        %v1255 = vsel %vm633, %v1253, %v1254
        %v1256 = vrot.slane %v1133, 1
        %v1257 = vsel %vm633, %v1254, %v1256
        %v1258 = vrot.slane %v1134, 1
        %v1259 = vrot.slane %v1135, 1
        %v1260 = vsel %vm633, %v1258, %v1259
        %v1261 = vrot.slane %v1136, 1
        %v1262 = vsel %vm633, %v1259, %v1261
        %v1263 = vrot.slane %v1137, 1
        %v1264 = vrot.slane %v1138, 1
        %v1265 = vsel %vm633, %v1263, %v1264
        %v1266 = vrot.slane %v1139, 1
        %v1267 = vsel %vm633, %v1264, %v1266
        %v1300 = vadd.f32 %v1057, %v1190
        %v1301 = vadd.f32 %v1058, %v1192
        %v1302 = vadd.f32 %v1059, %v1195
        %v1303 = vadd.f32 %v1060, %v1197
        %v1304 = vadd.f32 %v1061, %v1200
        %v1305 = vadd.f32 %v1062, %v1202
        %v1306 = vadd.f32 %v1063, %v1205
        %v1307 = vadd.f32 %v1064, %v1207
        %v1308 = vadd.f32 %v1065, %v1210
        %v1309 = vadd.f32 %v1066, %v1212
        %v1310 = vadd.f32 %v1067, %v1215
        %v1311 = vadd.f32 %v1068, %v1217
        %v1312 = vadd.f32 %v1069, %v1220
        %v1313 = vadd.f32 %v1070, %v1222
        %v1314 = vadd.f32 %v1071, %v1225
        %v1315 = vadd.f32 %v1072, %v1227
        %v1316 = vadd.f32 %v1073, %v1230
        %v1317 = vadd.f32 %v1074, %v1232
        %v1318 = vadd.f32 %v1075, %v1235
        %v1319 = vadd.f32 %v1076, %v1237
        %v1320 = vadd.f32 %v1077, %v1240
        %v1321 = vadd.f32 %v1078, %v1242
        %v1322 = vadd.f32 %v1079, %v1245
        %v1323 = vadd.f32 %v1080, %v1247
        %v1324 = vadd.f32 %v1081, %v1250
        %v1325 = vadd.f32 %v1082, %v1252
        %v1326 = vadd.f32 %v1083, %v1255
        %v1327 = vadd.f32 %v1084, %v1257
        %v1328 = vadd.f32 %v1085, %v1260
        %v1329 = vadd.f32 %v1086, %v1262
        %v1330 = vadd.f32 %v1087, %v1265
        %v1331 = vadd.f32 %v1088, %v1267
        %v1333 = vperm.slane %v459, 0
        %v1335 = vmul.f32 %v403, %v1333
        %v1336 = vmul.f32 %v404, %v1333
        %v1337 = vmul.f32 %v405, %v1333
        %v1338 = vmul.f32 %v406, %v1333
        %v1339 = vmul.f32 %v407, %v1333
        %v1340 = vmul.f32 %v408, %v1333
        %v1341 = vmul.f32 %v409, %v1333
        %v1342 = vmul.f32 %v410, %v1333
        %v1343 = vmul.f32 %v411, %v1333
        %v1344 = vmul.f32 %v412, %v1333
        %v1345 = vmul.f32 %v413, %v1333
        %v1346 = vmul.f32 %v414, %v1333
        %v1347 = vmul.f32 %v415, %v1333
        %v1348 = vmul.f32 %v416, %v1333
        %v1349 = vmul.f32 %v417, %v1333
        %v1350 = vmul.f32 %v418, %v1333
        %v1351 = vmul.f32 %v419, %v1333
        %v1352 = vmul.f32 %v420, %v1333
        %v1353 = vmul.f32 %v421, %v1333
        %v1354 = vmul.f32 %v422, %v1333
        %v1355 = vmul.f32 %v423, %v1333
        %v1356 = vmul.f32 %v424, %v1333
        %v1357 = vmul.f32 %v425, %v1333
        %v1358 = vmul.f32 %v426, %v1333
        %v1359 = vmul.f32 %v427, %v1333
        %v1360 = vmul.f32 %v428, %v1333
        %v1361 = vmul.f32 %v429, %v1333
        %v1362 = vmul.f32 %v430, %v1333
        %v1363 = vmul.f32 %v431, %v1333
        %v1364 = vmul.f32 %v432, %v1333
        %v1365 = vmul.f32 %v433, %v1333
        %v1366 = vmul.f32 %v434, %v1333
        %v1367 = vmul.f32 %v435, %v1333
        %v1368 = vmul.f32 %v436, %v1333
        %v1369 = vmul.f32 %v437, %v1333
        %v1370 = vmul.f32 %v438, %v1333
        %v1371 = vmul.f32 %v439, %v1333
        %v1372 = vmul.f32 %v440, %v1333
        %v1373 = vmul.f32 %v441, %v1333
        %v1374 = vmul.f32 %v442, %v1333
        %v1375 = vmul.f32 %v443, %v1333
        %v1376 = vmul.f32 %v444, %v1333
        %v1377 = vmul.f32 %v445, %v1333
        %v1378 = vmul.f32 %v446, %v1333
        %v1379 = vmul.f32 %v447, %v1333
        %v1380 = vmul.f32 %v448, %v1333
        %v1381 = vmul.f32 %v449, %v1333
        %v1382 = vmul.f32 %v450, %v1333
        %v1431 = vrot.slane %v1335, 2
        %v1432 = vrot.slane %v1336, 2
        %v1433 = vsel %vm877, %v1431, %v1432
        %v1434 = vrot.slane %v1337, 2
        %v1435 = vsel %vm877, %v1432, %v1434
        %v1436 = vrot.slane %v1338, 2
        %v1437 = vrot.slane %v1339, 2
        %v1438 = vsel %vm877, %v1436, %v1437
        %v1439 = vrot.slane %v1340, 2
        %v1440 = vsel %vm877, %v1437, %v1439
        %v1441 = vrot.slane %v1341, 2
        %v1442 = vrot.slane %v1342, 2
        %v1443 = vsel %vm877, %v1441, %v1442
        %v1444 = vrot.slane %v1343, 2
        %v1445 = vsel %vm877, %v1442, %v1444
        %v1446 = vrot.slane %v1344, 2
        %v1447 = vrot.slane %v1345, 2
        %v1448 = vsel %vm877, %v1446, %v1447
        %v1449 = vrot.slane %v1346, 2
        %v1450 = vsel %vm877, %v1447, %v1449
        %v1451 = vrot.slane %v1347, 2
        %v1452 = vrot.slane %v1348, 2
        %v1453 = vsel %vm877, %v1451, %v1452
        %v1454 = vrot.slane %v1349, 2
        %v1455 = vsel %vm877, %v1452, %v1454
        %v1456 = vrot.slane %v1350, 2
        %v1457 = vrot.slane %v1351, 2
        %v1458 = vsel %vm877, %v1456, %v1457
        %v1459 = vrot.slane %v1352, 2
        %v1460 = vsel %vm877, %v1457, %v1459
        %v1461 = vrot.slane %v1353, 2
        %v1462 = vrot.slane %v1354, 2
        %v1463 = vsel %vm877, %v1461, %v1462
        %v1464 = vrot.slane %v1355, 2
        %v1465 = vsel %vm877, %v1462, %v1464
        %v1466 = vrot.slane %v1356, 2
        %v1467 = vrot.slane %v1357, 2
        %v1468 = vsel %vm877, %v1466, %v1467
        %v1469 = vrot.slane %v1358, 2
        %v1470 = vsel %vm877, %v1467, %v1469
        %v1471 = vrot.slane %v1359, 2
        %v1472 = vrot.slane %v1360, 2
        %v1473 = vsel %vm877, %v1471, %v1472
        %v1474 = vrot.slane %v1361, 2
        %v1475 = vsel %vm877, %v1472, %v1474
        %v1476 = vrot.slane %v1362, 2
        %v1477 = vrot.slane %v1363, 2
        %v1478 = vsel %vm877, %v1476, %v1477
        %v1479 = vrot.slane %v1364, 2
        %v1480 = vsel %vm877, %v1477, %v1479
        %v1481 = vrot.slane %v1365, 2
        %v1482 = vrot.slane %v1366, 2
        %v1483 = vsel %vm877, %v1481, %v1482
        %v1484 = vrot.slane %v1367, 2
        %v1485 = vsel %vm877, %v1482, %v1484
        %v1486 = vrot.slane %v1368, 2
        %v1487 = vrot.slane %v1369, 2
        %v1488 = vsel %vm877, %v1486, %v1487
        %v1489 = vrot.slane %v1370, 2
        %v1490 = vsel %vm877, %v1487, %v1489
        %v1491 = vrot.slane %v1371, 2
        %v1492 = vrot.slane %v1372, 2
        %v1493 = vsel %vm877, %v1491, %v1492
        %v1494 = vrot.slane %v1373, 2
        %v1495 = vsel %vm877, %v1492, %v1494
        %v1496 = vrot.slane %v1374, 2
        %v1497 = vrot.slane %v1375, 2
        %v1498 = vsel %vm877, %v1496, %v1497
        %v1499 = vrot.slane %v1376, 2
        %v1500 = vsel %vm877, %v1497, %v1499
        %v1501 = vrot.slane %v1377, 2
        %v1502 = vrot.slane %v1378, 2
        %v1503 = vsel %vm877, %v1501, %v1502
        %v1504 = vrot.slane %v1379, 2
        %v1505 = vsel %vm877, %v1502, %v1504
        %v1506 = vrot.slane %v1380, 2
        %v1507 = vrot.slane %v1381, 2
        %v1508 = vsel %vm877, %v1506, %v1507
        %v1509 = vrot.slane %v1382, 2
        %v1510 = vsel %vm877, %v1507, %v1509
        %v1543 = vadd.f32 %v1300, %v1433
        %v1544 = vadd.f32 %v1301, %v1435
        %v1545 = vadd.f32 %v1302, %v1438
        %v1546 = vadd.f32 %v1303, %v1440
        %v1547 = vadd.f32 %v1304, %v1443
        %v1548 = vadd.f32 %v1305, %v1445
        %v1549 = vadd.f32 %v1306, %v1448
        %v1550 = vadd.f32 %v1307, %v1450
        %v1551 = vadd.f32 %v1308, %v1453
        %v1552 = vadd.f32 %v1309, %v1455
        %v1553 = vadd.f32 %v1310, %v1458
        %v1554 = vadd.f32 %v1311, %v1460
        %v1555 = vadd.f32 %v1312, %v1463
        %v1556 = vadd.f32 %v1313, %v1465
        %v1557 = vadd.f32 %v1314, %v1468
        %v1558 = vadd.f32 %v1315, %v1470
        %v1559 = vadd.f32 %v1316, %v1473
        %v1560 = vadd.f32 %v1317, %v1475
        %v1561 = vadd.f32 %v1318, %v1478
        %v1562 = vadd.f32 %v1319, %v1480
        %v1563 = vadd.f32 %v1320, %v1483
        %v1564 = vadd.f32 %v1321, %v1485
        %v1565 = vadd.f32 %v1322, %v1488
        %v1566 = vadd.f32 %v1323, %v1490
        %v1567 = vadd.f32 %v1324, %v1493
        %v1568 = vadd.f32 %v1325, %v1495
        %v1569 = vadd.f32 %v1326, %v1498
        %v1570 = vadd.f32 %v1327, %v1500
        %v1571 = vadd.f32 %v1328, %v1503
        %v1572 = vadd.f32 %v1329, %v1505
        %v1573 = vadd.f32 %v1330, %v1508
        %v1574 = vadd.f32 %v1331, %v1510
        %v1576 = vperm.slane %v460, 0
        %v1578 = vmul.f32 %v406, %v1576
        %v1579 = vmul.f32 %v407, %v1576
        %v1580 = vmul.f32 %v409, %v1576
        %v1581 = vmul.f32 %v410, %v1576
        %v1582 = vmul.f32 %v412, %v1576
        %v1583 = vmul.f32 %v413, %v1576
        %v1584 = vmul.f32 %v415, %v1576
        %v1585 = vmul.f32 %v416, %v1576
        %v1586 = vmul.f32 %v418, %v1576
        %v1587 = vmul.f32 %v419, %v1576
        %v1588 = vmul.f32 %v421, %v1576
        %v1589 = vmul.f32 %v422, %v1576
        %v1590 = vmul.f32 %v424, %v1576
        %v1591 = vmul.f32 %v425, %v1576
        %v1592 = vmul.f32 %v427, %v1576
        %v1593 = vmul.f32 %v428, %v1576
        %v1594 = vmul.f32 %v430, %v1576
        %v1595 = vmul.f32 %v431, %v1576
        %v1596 = vmul.f32 %v433, %v1576
        %v1597 = vmul.f32 %v434, %v1576
        %v1598 = vmul.f32 %v436, %v1576
        %v1599 = vmul.f32 %v437, %v1576
        %v1600 = vmul.f32 %v439, %v1576
        %v1601 = vmul.f32 %v440, %v1576
        %v1602 = vmul.f32 %v442, %v1576
        %v1603 = vmul.f32 %v443, %v1576
        %v1604 = vmul.f32 %v445, %v1576
        %v1605 = vmul.f32 %v446, %v1576
        %v1606 = vmul.f32 %v448, %v1576
        %v1607 = vmul.f32 %v449, %v1576
        %v1608 = vmul.f32 %v451, %v1576
        %v1609 = vmul.f32 %v452, %v1576
        %v1610 = vadd.f32 %v1543, %v1578
        %v1611 = vadd.f32 %v1544, %v1579
        %v1612 = vadd.f32 %v1545, %v1580
        %v1613 = vadd.f32 %v1546, %v1581
        %v1614 = vadd.f32 %v1547, %v1582
        %v1615 = vadd.f32 %v1548, %v1583
        %v1616 = vadd.f32 %v1549, %v1584
        %v1617 = vadd.f32 %v1550, %v1585
        %v1618 = vadd.f32 %v1551, %v1586
        %v1619 = vadd.f32 %v1552, %v1587
        %v1620 = vadd.f32 %v1553, %v1588
        %v1621 = vadd.f32 %v1554, %v1589
        %v1622 = vadd.f32 %v1555, %v1590
        %v1623 = vadd.f32 %v1556, %v1591
        %v1624 = vadd.f32 %v1557, %v1592
        %v1625 = vadd.f32 %v1558, %v1593
        %v1626 = vadd.f32 %v1559, %v1594
        %v1627 = vadd.f32 %v1560, %v1595
        %v1628 = vadd.f32 %v1561, %v1596
        %v1629 = vadd.f32 %v1562, %v1597
        %v1630 = vadd.f32 %v1563, %v1598
        %v1631 = vadd.f32 %v1564, %v1599
        %v1632 = vadd.f32 %v1565, %v1600
        %v1633 = vadd.f32 %v1566, %v1601
        %v1634 = vadd.f32 %v1567, %v1602
        %v1635 = vadd.f32 %v1568, %v1603
        %v1636 = vadd.f32 %v1569, %v1604
        %v1637 = vadd.f32 %v1570, %v1605
        %v1638 = vadd.f32 %v1571, %v1606
        %v1639 = vadd.f32 %v1572, %v1607
        %v1640 = vadd.f32 %v1573, %v1608
        %v1641 = vadd.f32 %v1574, %v1609
        %v1643 = vperm.slane %v461, 0
        %v1645 = vmul.f32 %v406, %v1643
        %v1646 = vmul.f32 %v407, %v1643
        %v1647 = vmul.f32 %v408, %v1643
        %v1648 = vmul.f32 %v409, %v1643
        %v1649 = vmul.f32 %v410, %v1643
        %v1650 = vmul.f32 %v411, %v1643
        %v1651 = vmul.f32 %v412, %v1643
        %v1652 = vmul.f32 %v413, %v1643
        %v1653 = vmul.f32 %v414, %v1643
        %v1654 = vmul.f32 %v415, %v1643
        %v1655 = vmul.f32 %v416, %v1643
        %v1656 = vmul.f32 %v417, %v1643
        %v1657 = vmul.f32 %v418, %v1643
        %v1658 = vmul.f32 %v419, %v1643
        %v1659 = vmul.f32 %v420, %v1643
        %v1660 = vmul.f32 %v421, %v1643
        %v1661 = vmul.f32 %v422, %v1643
        %v1662 = vmul.f32 %v423, %v1643
        %v1663 = vmul.f32 %v424, %v1643
        %v1664 = vmul.f32 %v425, %v1643
        %v1665 = vmul.f32 %v426, %v1643
        %v1666 = vmul.f32 %v427, %v1643
        %v1667 = vmul.f32 %v428, %v1643
        %v1668 = vmul.f32 %v429, %v1643
        %v1669 = vmul.f32 %v430, %v1643
        %v1670 = vmul.f32 %v431, %v1643
        %v1671 = vmul.f32 %v432, %v1643
        %v1672 = vmul.f32 %v433, %v1643
        %v1673 = vmul.f32 %v434, %v1643
        %v1674 = vmul.f32 %v435, %v1643
        %v1675 = vmul.f32 %v436, %v1643
        %v1676 = vmul.f32 %v437, %v1643
        %v1677 = vmul.f32 %v438, %v1643
        %v1678 = vmul.f32 %v439, %v1643
        %v1679 = vmul.f32 %v440, %v1643
        %v1680 = vmul.f32 %v441, %v1643
        %v1681 = vmul.f32 %v442, %v1643
        %v1682 = vmul.f32 %v443, %v1643
        %v1683 = vmul.f32 %v444, %v1643
        %v1684 = vmul.f32 %v445, %v1643
        %v1685 = vmul.f32 %v446, %v1643
        %v1686 = vmul.f32 %v447, %v1643
        %v1687 = vmul.f32 %v448, %v1643
        %v1688 = vmul.f32 %v449, %v1643
        %v1689 = vmul.f32 %v450, %v1643
        %v1690 = vmul.f32 %v451, %v1643
        %v1691 = vmul.f32 %v452, %v1643
        %v1692 = vmul.f32 %v453, %v1643
        %v1741 = vrot.slane %v1645, 1
        %v1742 = vrot.slane %v1646, 1
        %v1743 = vsel %vm633, %v1741, %v1742
        %v1744 = vrot.slane %v1647, 1
        %v1745 = vsel %vm633, %v1742, %v1744
        %v1746 = vrot.slane %v1648, 1
        %v1747 = vrot.slane %v1649, 1
        %v1748 = vsel %vm633, %v1746, %v1747
        %v1749 = vrot.slane %v1650, 1
        %v1750 = vsel %vm633, %v1747, %v1749
        %v1751 = vrot.slane %v1651, 1
        %v1752 = vrot.slane %v1652, 1
        %v1753 = vsel %vm633, %v1751, %v1752
        %v1754 = vrot.slane %v1653, 1
        %v1755 = vsel %vm633, %v1752, %v1754
        %v1756 = vrot.slane %v1654, 1
        %v1757 = vrot.slane %v1655, 1
        %v1758 = vsel %vm633, %v1756, %v1757
        %v1759 = vrot.slane %v1656, 1
        %v1760 = vsel %vm633, %v1757, %v1759
        %v1761 = vrot.slane %v1657, 1
        %v1762 = vrot.slane %v1658, 1
        %v1763 = vsel %vm633, %v1761, %v1762
        %v1764 = vrot.slane %v1659, 1
        %v1765 = vsel %vm633, %v1762, %v1764
        %v1766 = vrot.slane %v1660, 1
        %v1767 = vrot.slane %v1661, 1
        %v1768 = vsel %vm633, %v1766, %v1767
        %v1769 = vrot.slane %v1662, 1
        %v1770 = vsel %vm633, %v1767, %v1769
        %v1771 = vrot.slane %v1663, 1
        %v1772 = vrot.slane %v1664, 1
        %v1773 = vsel %vm633, %v1771, %v1772
        %v1774 = vrot.slane %v1665, 1
        %v1775 = vsel %vm633, %v1772, %v1774
        %v1776 = vrot.slane %v1666, 1
        %v1777 = vrot.slane %v1667, 1
        %v1778 = vsel %vm633, %v1776, %v1777
        %v1779 = vrot.slane %v1668, 1
        %v1780 = vsel %vm633, %v1777, %v1779
        %v1781 = vrot.slane %v1669, 1
        %v1782 = vrot.slane %v1670, 1
        %v1783 = vsel %vm633, %v1781, %v1782
        %v1784 = vrot.slane %v1671, 1
        %v1785 = vsel %vm633, %v1782, %v1784
        %v1786 = vrot.slane %v1672, 1
        %v1787 = vrot.slane %v1673, 1
        %v1788 = vsel %vm633, %v1786, %v1787
        %v1789 = vrot.slane %v1674, 1
        %v1790 = vsel %vm633, %v1787, %v1789
        %v1791 = vrot.slane %v1675, 1
        %v1792 = vrot.slane %v1676, 1
        %v1793 = vsel %vm633, %v1791, %v1792
        %v1794 = vrot.slane %v1677, 1
        %v1795 = vsel %vm633, %v1792, %v1794
        %v1796 = vrot.slane %v1678, 1
        %v1797 = vrot.slane %v1679, 1
        %v1798 = vsel %vm633, %v1796, %v1797
        %v1799 = vrot.slane %v1680, 1
        %v1800 = vsel %vm633, %v1797, %v1799
        %v1801 = vrot.slane %v1681, 1
        %v1802 = vrot.slane %v1682, 1
        %v1803 = vsel %vm633, %v1801, %v1802
        %v1804 = vrot.slane %v1683, 1
        %v1805 = vsel %vm633, %v1802, %v1804
        %v1806 = vrot.slane %v1684, 1
        %v1807 = vrot.slane %v1685, 1
        %v1808 = vsel %vm633, %v1806, %v1807
        %v1809 = vrot.slane %v1686, 1
        %v1810 = vsel %vm633, %v1807, %v1809
        %v1811 = vrot.slane %v1687, 1
        %v1812 = vrot.slane %v1688, 1
        %v1813 = vsel %vm633, %v1811, %v1812
        %v1814 = vrot.slane %v1689, 1
        %v1815 = vsel %vm633, %v1812, %v1814
        %v1816 = vrot.slane %v1690, 1
        %v1817 = vrot.slane %v1691, 1
        %v1818 = vsel %vm633, %v1816, %v1817
        %v1819 = vrot.slane %v1692, 1
        %v1820 = vsel %vm633, %v1817, %v1819
        %v1853 = vadd.f32 %v1610, %v1743
        %v1854 = vadd.f32 %v1611, %v1745
        %v1855 = vadd.f32 %v1612, %v1748
        %v1856 = vadd.f32 %v1613, %v1750
        %v1857 = vadd.f32 %v1614, %v1753
        %v1858 = vadd.f32 %v1615, %v1755
        %v1859 = vadd.f32 %v1616, %v1758
        %v1860 = vadd.f32 %v1617, %v1760
        %v1861 = vadd.f32 %v1618, %v1763
        %v1862 = vadd.f32 %v1619, %v1765
        %v1863 = vadd.f32 %v1620, %v1768
        %v1864 = vadd.f32 %v1621, %v1770
        %v1865 = vadd.f32 %v1622, %v1773
        %v1866 = vadd.f32 %v1623, %v1775
        %v1867 = vadd.f32 %v1624, %v1778
        %v1868 = vadd.f32 %v1625, %v1780
        %v1869 = vadd.f32 %v1626, %v1783
        %v1870 = vadd.f32 %v1627, %v1785
        %v1871 = vadd.f32 %v1628, %v1788
        %v1872 = vadd.f32 %v1629, %v1790
        %v1873 = vadd.f32 %v1630, %v1793
        %v1874 = vadd.f32 %v1631, %v1795
        %v1875 = vadd.f32 %v1632, %v1798
        %v1876 = vadd.f32 %v1633, %v1800
        %v1877 = vadd.f32 %v1634, %v1803
        %v1878 = vadd.f32 %v1635, %v1805
        %v1879 = vadd.f32 %v1636, %v1808
        %v1880 = vadd.f32 %v1637, %v1810
        %v1881 = vadd.f32 %v1638, %v1813
        %v1882 = vadd.f32 %v1639, %v1815
        %v1883 = vadd.f32 %v1640, %v1818
        %v1884 = vadd.f32 %v1641, %v1820
        %v1886 = vperm.slane %v462, 0
        %v1888 = vmul.f32 %v406, %v1886
        %v1889 = vmul.f32 %v407, %v1886
        %v1890 = vmul.f32 %v408, %v1886
        %v1891 = vmul.f32 %v409, %v1886
        %v1892 = vmul.f32 %v410, %v1886
        %v1893 = vmul.f32 %v411, %v1886
        %v1894 = vmul.f32 %v412, %v1886
        %v1895 = vmul.f32 %v413, %v1886
        %v1896 = vmul.f32 %v414, %v1886
        %v1897 = vmul.f32 %v415, %v1886
        %v1898 = vmul.f32 %v416, %v1886
        %v1899 = vmul.f32 %v417, %v1886
        %v1900 = vmul.f32 %v418, %v1886
        %v1901 = vmul.f32 %v419, %v1886
        %v1902 = vmul.f32 %v420, %v1886
        %v1903 = vmul.f32 %v421, %v1886
        %v1904 = vmul.f32 %v422, %v1886
        %v1905 = vmul.f32 %v423, %v1886
        %v1906 = vmul.f32 %v424, %v1886
        %v1907 = vmul.f32 %v425, %v1886
        %v1908 = vmul.f32 %v426, %v1886
        %v1909 = vmul.f32 %v427, %v1886
        %v1910 = vmul.f32 %v428, %v1886
        %v1911 = vmul.f32 %v429, %v1886
        %v1912 = vmul.f32 %v430, %v1886
        %v1913 = vmul.f32 %v431, %v1886
        %v1914 = vmul.f32 %v432, %v1886
        %v1915 = vmul.f32 %v433, %v1886
        %v1916 = vmul.f32 %v434, %v1886
        %v1917 = vmul.f32 %v435, %v1886
        %v1918 = vmul.f32 %v436, %v1886
        %v1919 = vmul.f32 %v437, %v1886
        %v1920 = vmul.f32 %v438, %v1886
        %v1921 = vmul.f32 %v439, %v1886
        %v1922 = vmul.f32 %v440, %v1886
        %v1923 = vmul.f32 %v441, %v1886
        %v1924 = vmul.f32 %v442, %v1886
        %v1925 = vmul.f32 %v443, %v1886
        %v1926 = vmul.f32 %v444, %v1886
        %v1927 = vmul.f32 %v445, %v1886
        %v1928 = vmul.f32 %v446, %v1886
        %v1929 = vmul.f32 %v447, %v1886
        %v1930 = vmul.f32 %v448, %v1886
        %v1931 = vmul.f32 %v449, %v1886
        %v1932 = vmul.f32 %v450, %v1886
        %v1933 = vmul.f32 %v451, %v1886
        %v1934 = vmul.f32 %v452, %v1886
        %v1935 = vmul.f32 %v453, %v1886
        %v1984 = vrot.slane %v1888, 2
        %v1985 = vrot.slane %v1889, 2
        %v1986 = vsel %vm877, %v1984, %v1985
        %v1987 = vrot.slane %v1890, 2
        %v1988 = vsel %vm877, %v1985, %v1987
        %v1989 = vrot.slane %v1891, 2
        %v1990 = vrot.slane %v1892, 2
        %v1991 = vsel %vm877, %v1989, %v1990
        %v1992 = vrot.slane %v1893, 2
        %v1993 = vsel %vm877, %v1990, %v1992
        %v1994 = vrot.slane %v1894, 2
        %v1995 = vrot.slane %v1895, 2
        %v1996 = vsel %vm877, %v1994, %v1995
        %v1997 = vrot.slane %v1896, 2
        %v1998 = vsel %vm877, %v1995, %v1997
        %v1999 = vrot.slane %v1897, 2
        %v2000 = vrot.slane %v1898, 2
        %v2001 = vsel %vm877, %v1999, %v2000
        %v2002 = vrot.slane %v1899, 2
        %v2003 = vsel %vm877, %v2000, %v2002
        %v2004 = vrot.slane %v1900, 2
        %v2005 = vrot.slane %v1901, 2
        %v2006 = vsel %vm877, %v2004, %v2005
        %v2007 = vrot.slane %v1902, 2
        %v2008 = vsel %vm877, %v2005, %v2007
        %v2009 = vrot.slane %v1903, 2
        %v2010 = vrot.slane %v1904, 2
        %v2011 = vsel %vm877, %v2009, %v2010
        %v2012 = vrot.slane %v1905, 2
        %v2013 = vsel %vm877, %v2010, %v2012
        %v2014 = vrot.slane %v1906, 2
        %v2015 = vrot.slane %v1907, 2
        %v2016 = vsel %vm877, %v2014, %v2015
        %v2017 = vrot.slane %v1908, 2
        %v2018 = vsel %vm877, %v2015, %v2017
        %v2019 = vrot.slane %v1909, 2
        %v2020 = vrot.slane %v1910, 2
        %v2021 = vsel %vm877, %v2019, %v2020
        %v2022 = vrot.slane %v1911, 2
        %v2023 = vsel %vm877, %v2020, %v2022
        %v2024 = vrot.slane %v1912, 2
        %v2025 = vrot.slane %v1913, 2
        %v2026 = vsel %vm877, %v2024, %v2025
        %v2027 = vrot.slane %v1914, 2
        %v2028 = vsel %vm877, %v2025, %v2027
        %v2029 = vrot.slane %v1915, 2
        %v2030 = vrot.slane %v1916, 2
        %v2031 = vsel %vm877, %v2029, %v2030
        %v2032 = vrot.slane %v1917, 2
        %v2033 = vsel %vm877, %v2030, %v2032
        %v2034 = vrot.slane %v1918, 2
        %v2035 = vrot.slane %v1919, 2
        %v2036 = vsel %vm877, %v2034, %v2035
        %v2037 = vrot.slane %v1920, 2
        %v2038 = vsel %vm877, %v2035, %v2037
        %v2039 = vrot.slane %v1921, 2
        %v2040 = vrot.slane %v1922, 2
        %v2041 = vsel %vm877, %v2039, %v2040
        %v2042 = vrot.slane %v1923, 2
        %v2043 = vsel %vm877, %v2040, %v2042
        %v2044 = vrot.slane %v1924, 2
        %v2045 = vrot.slane %v1925, 2
        %v2046 = vsel %vm877, %v2044, %v2045
        %v2047 = vrot.slane %v1926, 2
        %v2048 = vsel %vm877, %v2045, %v2047
        %v2049 = vrot.slane %v1927, 2
        %v2050 = vrot.slane %v1928, 2
        %v2051 = vsel %vm877, %v2049, %v2050
        %v2052 = vrot.slane %v1929, 2
        %v2053 = vsel %vm877, %v2050, %v2052
        %v2054 = vrot.slane %v1930, 2
        %v2055 = vrot.slane %v1931, 2
        %v2056 = vsel %vm877, %v2054, %v2055
        %v2057 = vrot.slane %v1932, 2
        %v2058 = vsel %vm877, %v2055, %v2057
        %v2059 = vrot.slane %v1933, 2
        %v2060 = vrot.slane %v1934, 2
        %v2061 = vsel %vm877, %v2059, %v2060
        %v2062 = vrot.slane %v1935, 2
        %v2063 = vsel %vm877, %v2060, %v2062
        %v2096 = vadd.f32 %v1853, %v1986
        %v2097 = vadd.f32 %v1854, %v1988
        %v2098 = vadd.f32 %v1855, %v1991
        %v2099 = vadd.f32 %v1856, %v1993
        %v2100 = vadd.f32 %v1857, %v1996
        %v2101 = vadd.f32 %v1858, %v1998
        %v2102 = vadd.f32 %v1859, %v2001
        %v2103 = vadd.f32 %v1860, %v2003
        %v2104 = vadd.f32 %v1861, %v2006
        %v2105 = vadd.f32 %v1862, %v2008
        %v2106 = vadd.f32 %v1863, %v2011
        %v2107 = vadd.f32 %v1864, %v2013
        %v2108 = vadd.f32 %v1865, %v2016
        %v2109 = vadd.f32 %v1866, %v2018
        %v2110 = vadd.f32 %v1867, %v2021
        %v2111 = vadd.f32 %v1868, %v2023
        %v2112 = vadd.f32 %v1869, %v2026
        %v2113 = vadd.f32 %v1870, %v2028
        %v2114 = vadd.f32 %v1871, %v2031
        %v2115 = vadd.f32 %v1872, %v2033
        %v2116 = vadd.f32 %v1873, %v2036
        %v2117 = vadd.f32 %v1874, %v2038
        %v2118 = vadd.f32 %v1875, %v2041
        %v2119 = vadd.f32 %v1876, %v2043
        %v2120 = vadd.f32 %v1877, %v2046
        %v2121 = vadd.f32 %v1878, %v2048
        %v2122 = vadd.f32 %v1879, %v2051
        %v2123 = vadd.f32 %v1880, %v2053
        %v2124 = vadd.f32 %v1881, %v2056
        %v2125 = vadd.f32 %v1882, %v2058
        %v2126 = vadd.f32 %v1883, %v2061
        %v2127 = vadd.f32 %v1884, %v2063
        %v2128 = vld [vmem:[#allocation7] sm:$0xff]
        %v2129 = vld [vmem:[#allocation7 + $0x8] sm:$0xff]
        %v2130 = vld [vmem:[#allocation7 + $0x10] sm:$0xf]
        %v2132 = vsel %vm293, %v2128, 0
        %v2135 = vsel %vm293, %v2129, 0
        %v2138 = vsel %vm293, %v2130, 0
        %v2141 = vsel %vm293, %v2096, 0
        %v2144 = vsel %vm293, %v2097, 0
        %v2147 = vsel %vm293, %v2098, 0
        %v2150 = vsel %vm293, %v2099, 0
        %v2153 = vsel %vm293, %v2100, 0
        %v2156 = vsel %vm293, %v2101, 0
        %v2159 = vsel %vm293, %v2102, 0
        %v2162 = vsel %vm293, %v2103, 0
        %v2165 = vsel %vm293, %v2104, 0
        %v2168 = vsel %vm293, %v2105, 0
        %v2171 = vsel %vm293, %v2106, 0
        %v2174 = vsel %vm293, %v2107, 0
        %v2177 = vsel %vm293, %v2108, 0
        %v2180 = vsel %vm293, %v2109, 0
        %v2183 = vsel %vm293, %v2110, 0
        %v2186 = vsel %vm293, %v2111, 0
        %v2189 = vsel %vm293, %v2112, 0
        %v2192 = vsel %vm293, %v2113, 0
        %v2195 = vsel %vm293, %v2114, 0
        %v2198 = vsel %vm293, %v2115, 0
        %v2201 = vsel %vm293, %v2116, 0
        %v2204 = vsel %vm293, %v2117, 0
        %v2207 = vsel %vm293, %v2118, 0
        %v2210 = vsel %vm293, %v2119, 0
        %v2213 = vsel %vm293, %v2120, 0
        %v2216 = vsel %vm293, %v2121, 0
        %v2219 = vsel %vm293, %v2122, 0
        %v2222 = vsel %vm293, %v2123, 0
        %v2225 = vsel %vm293, %v2124, 0
        %v2228 = vsel %vm293, %v2125, 0
        %v2231 = vsel %vm293, %v2126, 0
        %v2234 = vsel %vm293, %v2127, 0
        %2236 = vmatpush.xpose.msra.mxu0 %v2186
        %2237 = vmatpush.xpose.msra.mxu0 %v2183
        %2238 = vmatpush.xpose.msra.mxu0 %v2180
        %2239 = vmatpush.xpose.msra.mxu0 %v2177
        %2240 = vmatpush.xpose.msra.mxu0 %v2174
        %2241 = vmatpush.xpose.msra.mxu0 %v2171
        %2242 = vmatpush.xpose.msra.mxu0 %v2168
        %2243 = vmatpush.xpose.msra.mxu0 %v2165
        %2244 = vmatpush.xpose.msra.mxu0 %v2162
        %2245 = vmatpush.xpose.msra.mxu0 %v2159
        %2246 = vmatpush.xpose.msra.mxu0 %v2156
        %2247 = vmatpush.xpose.msra.mxu0 %v2153
        %2248 = vmatpush.xpose.msra.mxu0 %v2150
        %2249 = vmatpush.xpose.msra.mxu0 %v2147
        %2250 = vmatpush.xpose.msra.mxu0 %v2144
        %2251 = vmatpush.xpose.msra.mxu0 %v2141
        %2252 = vmatmul.f32.gmra.mxu0 %v2132
        %v2253 = vpop.f32.mrf.mxu0
        %v2254 = vadd.f32 0.0, %v2253
        %2255 = vmatmul.f32.gmra.mxu0 %v2135
        %v2256 = vpop.f32.mrf.mxu0
        %v2257 = vadd.f32 0.0, %v2256
        %2258 = vmatmul.f32.gmra.mxu0 %v2138
        %v2259 = vpop.f32.mrf.mxu0
        %v2260 = vadd.f32 0.0, %v2259
        %2261 = vdwg.mxu0
        %2262 = vmatpush.xpose.msra.mxu0 %v2234
        %2263 = vmatpush.xpose.msra.mxu0 %v2231
        %2264 = vmatpush.xpose.msra.mxu0 %v2228
        %2265 = vmatpush.xpose.msra.mxu0 %v2225
        %2266 = vmatpush.xpose.msra.mxu0 %v2222
        %2267 = vmatpush.xpose.msra.mxu0 %v2219
        %2268 = vmatpush.xpose.msra.mxu0 %v2216
        %2269 = vmatpush.xpose.msra.mxu0 %v2213
        %2270 = vmatpush.xpose.msra.mxu0 %v2210
        %2271 = vmatpush.xpose.msra.mxu0 %v2207
        %2272 = vmatpush.xpose.msra.mxu0 %v2204
        %2273 = vmatpush.xpose.msra.mxu0 %v2201
        %2274 = vmatpush.xpose.msra.mxu0 %v2198
        %2275 = vmatpush.xpose.msra.mxu0 %v2195
        %2276 = vmatpush.xpose.msra.mxu0 %v2192
        %2277 = vmatpush.xpose.msra.mxu0 %v2189
        %2278 = vmatmul.f32.gmra.mxu0 %v2132
        %v2279 = vpop.f32.mrf.mxu0
        %v2280 = vadd.f32 0.0, %v2279
        %2281 = vmatmul.f32.gmra.mxu0 %v2135
        %v2282 = vpop.f32.mrf.mxu0
        %v2283 = vadd.f32 0.0, %v2282
        %2284 = vmatmul.f32.gmra.mxu0 %v2138
        %v2285 = vpop.f32.mrf.mxu0
        %v2286 = vadd.f32 0.0, %v2285
        %2287 = vdwg.mxu0
        %vm2288 = vcmp.ge.f32.partialorder %v2254, 0.0
        %vm2289 = vcmp.ge.f32.partialorder %v2280, 0.0
        %vm2290 = vcmp.ge.f32.partialorder %v2257, 0.0
        %vm2291 = vcmp.ge.f32.partialorder %v2283, 0.0
        %vm2292 = vcmp.ge.f32.partialorder %v2260, 0.0
        %vm2293 = vcmp.ge.f32.partialorder %v2286, 0.0
        %v2294 = vmul.f32 %v2254, 0.01
        %v2295 = vmul.f32 %v2280, 0.01
        %v2296 = vmul.f32 %v2257, 0.01
        %v2297 = vmul.f32 %v2283, 0.01
        %v2298 = vmul.f32 %v2260, 0.01
        %v2299 = vmul.f32 %v2286, 0.01
        %v2300 = vsel %vm2288, %v2254, %v2294
        %v2301 = vsel %vm2289, %v2280, %v2295
        %v2302 = vsel %vm2290, %v2257, %v2296
        %v2303 = vsel %vm2291, %v2283, %v2297
        %v2304 = vsel %vm2292, %v2260, %v2298
        %v2305 = vsel %vm2293, %v2286, %v2299
        %v2308 = vrot.slane %v2301, 4
        %vm2309 = vcmask 1043456
        %v2310 = vsel %vm2309, %v2300, %v2308
        %2312 = vst [vmem:[%s287] sm:$0x77] %v2310
        %2313 = vst [vmem:[%s292] sm:$0xff] %v2302
        %2314 = vst [vmem:[%s292 + $0x8] sm:$0xff] %v2303
        %2315 = vst [vmem:[%s292 + $0x10] sm:$0xf] %v2304
        %2316 = vst [vmem:[%s292 + $0x18] sm:$0xf] %v2305
        %p2317 = scmp.lt.s32.totalorder %s21, 1
        %s2318 = scalar_select %p2317, %s21, 1
        %s2319 = smul.addr %s2318, 2
        %s2320 = smul.addr %s2319, 4
        %s2321 = scalar_lea.vmem %s4, %s2320
        %p2322 = scmp.lt.s32.totalorder %s21, 1
        %s2323 = scalar_select %p2322, %s21, 1
        %s2324 = smul.addr %s2323, 4
        %s2325 = smul.addr %s2324, 8
        %s2326 = scalar_lea.vmem %s5, %s2325
        // Predicated region
        $region49: #{tpu_custom_call.1} parent=35 // pred_check
          %p2327 = pneg %p128
        $region50: #{tpu_custom_call.1} parent=35 // pred_check_branch
          %2329 = sbr.rel (%p2327) target = $region52
        $region51: #{tpu_custom_call.1} parent=35 // pred_region
          _
        $region52: #{tpu_custom_call.1} parent=35 // pred_fallthru
          _
        // Predicated region
        $region53: #{tpu_custom_call.1} parent=35 // pred_check
          %p2330 = pneg %p154
        $region54: #{tpu_custom_call.1} parent=35 // pred_check_branch
          %2332 = sbr.rel (%p2330) target = $region56
        $region55: #{tpu_custom_call.1} parent=35 // pred_region
          _
        $region56: #{tpu_custom_call.1} parent=35 // pred_fallthru
          _
      $region36: #{tpu_custom_call.1} parent=5 // pred_fallthru
        _
      %p2333 = scmp.le.s32.totalorder 2, %s16
      // Predicated region
      $region57: #{tpu_custom_call.1} parent=5 // pred_check
        %p2334 = pneg %p2333
      $region58: #{tpu_custom_call.1} parent=5 // pred_check_branch
        %2336 = sbr.rel (%p2334) target = $region60
      $region59: #{tpu_custom_call.1} parent=5 // pred_region
        %s2337 = ssub.s32 %s16, 2
        // Predicated region
        $region61: #{tpu_custom_call.1} parent=59 // pred_check
          %p2338 = pneg %p134
        $region62: #{tpu_custom_call.1} parent=59 // pred_check_branch
          %2340 = sbr.rel (%p2338) target = $region64
        $region63: #{tpu_custom_call.1} parent=59 // pred_region
          %p2341 = scmp.lt.s32.totalorder %s22, 1
          %s2342 = scalar_select %p2341, %s22, 1
          %s2343 = smul.addr %s2342, 2
          %s2344 = smul.addr %s2343, 4
          %s2345 = scalar_lea.vmem %s4, %s2344
        $region64: #{tpu_custom_call.1} parent=59 // pred_fallthru
          _
        // Predicated region
        $region65: #{tpu_custom_call.1} parent=59 // pred_check
          %p2346 = pneg %p160
        $region66: #{tpu_custom_call.1} parent=59 // pred_check_branch
          %2348 = sbr.rel (%p2346) target = $region68
        $region67: #{tpu_custom_call.1} parent=59 // pred_region
          %p2349 = scmp.lt.s32.totalorder %s22, 1
          %s2350 = scalar_select %p2349, %s22, 1
          %s2351 = smul.addr %s2350, 4
          %s2352 = smul.addr %s2351, 8
          %s2353 = scalar_lea.vmem %s5, %s2352
        $region68: #{tpu_custom_call.1} parent=59 // pred_fallthru
          _
      $region60: #{tpu_custom_call.1} parent=5 // pred_fallthru
        _
    $region6: #{tpu_custom_call.1} parent=1 // loop_footer
      %s20 = sadd.s32 1, %s16
    $region7: #{tpu_custom_call.1} parent=1 // loop_footer_branch
      %15 = sbr.rel target = $region3
    $region8: #{tpu_custom_call.1} parent=1 // loop_exit
      _
    %2354 = vsyncpa [#allocation4], 1
    %s2355 = scalar_lea.sflag [#allocation4], 1
    %2356 = vsyncpa %s2355, 1
    %2357 = vsyncpa [#allocation6], 1

</llo_original>
